<compile_context>
chip_gen: v7x
topology: tpu7x:2x2x1
jax: 0.10.0
libtpu: 0.0.40
codegen_flags: <defaults>
</compile_context>

<pallas_src>
import math
import numpy as np
import jax
import jax.numpy as jnp
from jax.experimental import pallas as pl
from jax.experimental.pallas import tpu as pltpu


# ----------------------------------------------------------------------------
# Wavelet filter bank (deterministic, in-script; 'haar' == pywt.Wavelet('haar'))
# ----------------------------------------------------------------------------
_HAAR_DEC_LO = [1.0 / math.sqrt(2.0), 1.0 / math.sqrt(2.0)]
_HAAR_DEC_HI = [-1.0 / math.sqrt(2.0), 1.0 / math.sqrt(2.0)]


def build_idwt_matrices(input_height, input_width, wavename="haar"):
    """Faithful re-implementation of IDWT_2D.get_matrix() (numpy, no pywt)."""
    if wavename != "haar":
        raise NotImplementedError("only 'haar' filters are built in")
    band_low = list(_HAAR_DEC_LO)
    band_low.reverse()
    band_high = list(_HAAR_DEC_HI)
    band_high.reverse()
    assert len(band_low) == len(band_high)
    band_length = len(band_low)
    assert band_length % 2 == 0
    band_length_half = band_length // 2

    L1 = max(input_height, input_width)
    L = L1 // 2
    matrix_h = np.zeros((L, L1 + band_length - 2), dtype=np.float64)
    matrix_g = np.zeros((L1 - L, L1 + band_length - 2), dtype=np.float64)
    end = None if band_length_half == 1 else -band_length_half + 1

    index = 0
    for i in range(L):
        for j in range(band_length):
            matrix_h[i, index + j] = band_low[j]
        index += 2
    matrix_h_0 = matrix_h[0:input_height // 2, 0:input_height + band_length - 2]
    matrix_h_1 = matrix_h[0:input_width // 2, 0:input_width + band_length - 2]

    index = 0
    for i in range(L1 - L):
        for j in range(band_length):
            matrix_g[i, index + j] = band_high[j]
        index += 2
    matrix_g_0 = matrix_g[0:input_height - input_height // 2,
                          0:input_height + band_length - 2]
    matrix_g_1 = matrix_g[0:input_width - input_width // 2,
                          0:input_width + band_length - 2]

    matrix_h_0 = matrix_h_0[:, band_length_half - 1:end]
    matrix_h_1 = matrix_h_1[:, band_length_half - 1:end]
    matrix_h_1 = np.transpose(matrix_h_1)
    matrix_g_0 = matrix_g_0[:, band_length_half - 1:end]
    matrix_g_1 = matrix_g_1[:, band_length_half - 1:end]
    matrix_g_1 = np.transpose(matrix_g_1)

    # low_0: (H/2, H), low_1: (W, W/2), high_0: (H/2, H), high_1: (W, W/2)
    return (matrix_h_0.astype(np.float32), matrix_h_1.astype(np.float32),
            matrix_g_0.astype(np.float32), matrix_g_1.astype(np.float32))


# ----------------------------------------------------------------------------
# Small helpers
# ----------------------------------------------------------------------------
def _round_up(x, m):
    return ((x + m - 1) // m) * m


def _vmem_capacity_bytes():
    """Per-TensorCore VMEM capacity; conservative 64 MiB (v7x) if unknown."""
    try:
        info = pltpu.get_tpu_info()
        for attr in ("vmem_capacity_bytes", "vmem_size_bytes", "vmem_bytes"):
            v = getattr(info, attr, None)
            if v:
                return int(v)
    except Exception:
        pass
    return 64 * 1024 * 1024


def _filter_spec_kwargs(single_buffer):
    """Constant-index filter blocks: request single buffering when available."""
    if single_buffer and hasattr(pl, "Buffered"):
        return dict(pipeline_mode=pl.Buffered(1))
    return {}


# ----------------------------------------------------------------------------
# Kernels
# ----------------------------------------------------------------------------
def _idwt2d_kron_kernel(ll_ref, lh_ref, hl_ref, hh_ref,
                        kll_ref, klh_ref, khl_ref, khh_ref, out_ref):
    # bands: (TB, Hh*Wh); kron filters: (Hh*Wh, H*W); out: (TB, H*W)
    acc = jnp.dot(ll_ref[...], kll_ref[...], preferred_element_type=jnp.float32)
    acc = acc + jnp.dot(lh_ref[...], klh_ref[...],
                        preferred_element_type=jnp.float32)
    acc = acc + jnp.dot(hl_ref[...], khl_ref[...],
                        preferred_element_type=jnp.float32)
    acc = acc + jnp.dot(hh_ref[...], khh_ref[...],
                        preferred_element_type=jnp.float32)
    out_ref[...] = acc.astype(out_ref.dtype)


def _idwt2d_separable_kernel(ll_ref, lh_ref, hl_ref, hh_ref,
                             l1t_ref, h1t_ref, l0tb_ref, h0tb_ref, out_ref):
    # bands: (TB, Hhp, Wh); l1t/h1t: (Wh, W); l0tb/h0tb: (TB, H, Hhp); out: (TB, H, W)
    TB, Hhp, Wh = ll_ref.shape
    _, H, W = out_ref.shape

    # ---- width (column) reconstruction: fold TB into the matmul M dim ------
    ll2 = ll_ref[...].reshape(TB * Hhp, Wh)
    lh2 = lh_ref[...].reshape(TB * Hhp, Wh)
    hl2 = hl_ref[...].reshape(TB * Hhp, Wh)
    hh2 = hh_ref[...].reshape(TB * Hhp, Wh)
    l1t = l1t_ref[...]
    h1t = h1t_ref[...]

    low2 = (jnp.dot(ll2, l1t, preferred_element_type=jnp.float32)
            + jnp.dot(lh2, h1t, preferred_element_type=jnp.float32))
    high2 = (jnp.dot(hl2, l1t, preferred_element_type=jnp.float32)
             + jnp.dot(hh2, h1t, preferred_element_type=jnp.float32))

    low3 = low2.reshape(TB, Hhp, W)
    high3 = high2.reshape(TB, Hhp, W)

    # ---- height (row) reconstruction: batched matmul, filters come from a
    # constant-index (fetched-once) input, so no per-step broadcast ----------
    out3 = (jnp.einsum('bhk,bkw->bhw', l0tb_ref[...], low3,
                       preferred_element_type=jnp.float32)
            + jnp.einsum('bhk,bkw->bhw', h0tb_ref[...], high3,
                         preferred_element_type=jnp.float32))
    out_ref[...] = out3.astype(out_ref.dtype)


# ----------------------------------------------------------------------------
# Flattened (kron) path: small planes
# ----------------------------------------------------------------------------
def _idwt_2d_kron(LL, LH, HL, HH, l0, l1, h0, h1, vmem_limit):
    N, C, Hh, Wh = LL.shape
    H, W = 2 * Hh, 2 * Wh
    HW, HhWh = H * W, Hh * Wh
    dtype = LL.dtype
    itemsize = jnp.dtype(dtype).itemsize
    B = N * C

    l1t, h1t = l1.T, h1.T                      # (Wh, W)
    k_ll = np.kron(l0, l1t).astype(np.float32)  # (HhWh, HW)
    k_lh = np.kron(l0, h1t).astype(np.float32)
    k_hl = np.kron(h0, l1t).astype(np.float32)
    k_hh = np.kron(h0, h1t).astype(np.float32)
    kmats = [jnp.asarray(k, dtype=dtype) for k in (k_ll, k_lh, k_hl, k_hh)]

    # --- TB: as many planes per grid step as the VMEM budget allows ---------
    per_plane = 8 * HW * itemsize               # 2x(bands+out) buffers + temps
    filt_bytes = 2 * 4 * HhWh * HW * itemsize   # assume double-buffered filters
    budget = vmem_limit - filt_bytes - 6 * 2**20
    tb = max(8, budget // per_plane)
    tb = min(tb, 4096)
    # keep >= ~4 grid steps when B is large (2+ per v7x TensorCore)
    tb = min(tb, max(64, _round_up(pl.cdiv(B, 4), 8)))
    B8 = _round_up(B, 8)
    tb = min(tb, B8)
    tb = max(8, (tb // 8) * 8)
    num_blocks = pl.cdiv(B8, tb)
    B_pad = num_blocks * tb

    def prep(x):
        x = x.reshape(B, HhWh)                  # contiguous -> free reshape
        if B_pad != B:
            x = jnp.pad(x, ((0, B_pad - B), (0, 0)))
        return x

    bands = [prep(x) for x in (LL, LH, HL, HH)]

    band_spec = pl.BlockSpec((tb, HhWh), lambda b: (b, 0))
    out_spec = pl.BlockSpec((tb, HW), lambda b: (b, 0))

    def run(single_buffer_filters):
        kw = _filter_spec_kwargs(single_buffer_filters)
        filt_spec = pl.BlockSpec((HhWh, HW), lambda b: (0, 0), **kw)
        return pl.pallas_call(
            _idwt2d_kron_kernel,
            out_shape=jax.ShapeDtypeStruct((B_pad, HW), dtype),
            grid_spec=pltpu.PrefetchScalarGridSpec(
                num_scalar_prefetch=0,
                grid=(num_blocks,),
                in_specs=[band_spec] * 4 + [filt_spec] * 4,
                out_specs=out_spec,
            ),
            compiler_params=pltpu.CompilerParams(
                dimension_semantics=("parallel",),
                vmem_limit_bytes=vmem_limit),
        )(*bands, *kmats)

    try:
        out = run(True)
    except Exception:       # pl.Buffered(1) unsupported -> default buffering
        out = run(False)

    if B_pad != B:
        out = out[:B]
    return out.reshape(N, C, H, W)


# ----------------------------------------------------------------------------
# Separable (two-stage) path: larger planes
# ----------------------------------------------------------------------------
def _idwt_2d_separable(LL, LH, HL, HH, l0, l1, h0, h1, vmem_limit):
    N, C, Hh, Wh = LL.shape
    H, W = 2 * Hh, 2 * Wh
    dtype = LL.dtype
    itemsize = jnp.dtype(dtype).itemsize
    B = N * C

    Hhp = _round_up(Hh, 8)                      # sublane-aligned fold dim
    pad_h = Hhp - Hh

    l0t = l0.T.astype(np.float32)               # (H, Hh)
    h0t = h0.T.astype(np.float32)
    l1t = l1.T.astype(np.float32)               # (Wh, W)
    h1t = h1.T.astype(np.float32)
    if pad_h:
        # Zero filter columns meet zero-padded band rows -> result unchanged.
        l0t = np.pad(l0t, ((0, 0), (0, pad_h)))
        h0t = np.pad(h0t, ((0, 0), (0, pad_h)))

    # --- TB from the VMEM budget, targeting M = TB*Hh ~ 1024 ----------------
    per_plane = (2 * (4 * Hhp * Wh + H * W)     # double-buffered band + out blocks
                 + 3 * H * W                    # in-kernel f32 temporaries
                 + 4 * H * Hhp                  # pre-tiled height filters
                 ) * itemsize
    wfilt_bytes = 2 * 2 * Wh * W * itemsize
    budget = vmem_limit - wfilt_bytes - 6 * 2**20
    tb_vmem = max(1, budget // per_plane)
    tb_m = max(1, 1024 // Hhp)                  # also bounds batched-einsum unroll
    tb = int(min(tb_vmem, tb_m, 512))
    tb = min(tb, max(16, pl.cdiv(B, 4)))        # >= ~4 grid steps when B allows
    tb = max(1, min(tb, B))
    num_blocks = pl.cdiv(B, tb)
    B_pad = num_blocks * tb

    def prep(x):
        x = x.reshape(B, Hh, Wh)
        if pad_h:
            x = jnp.pad(x, ((0, 0), (0, pad_h), (0, 0)))
        if B_pad != B:
            x = jnp.pad(x, ((0, B_pad - B), (0, 0), (0, 0)))
        return x

    bands = [prep(x) for x in (LL, LH, HL, HH)]
    l1t_j = jnp.asarray(l1t, dtype=dtype)
    h1t_j = jnp.asarray(h1t, dtype=dtype)
    # Height filters pre-tiled across the TB planes; constant index_map means
    # they are DMA'd once and reused every grid step (no per-step broadcast).
    l0tb = jnp.broadcast_to(jnp.asarray(l0t, dtype=dtype)[None], (tb, H, Hhp))
    h0tb = jnp.broadcast_to(jnp.asarray(h0t, dtype=dtype)[None], (tb, H, Hhp))

    band_spec = pl.BlockSpec((tb, Hhp, Wh), lambda b: (b, 0, 0))
    out_spec = pl.BlockSpec((tb, H, W), lambda b: (b, 0, 0))

    def run(single_buffer_filters):
        kw = _filter_spec_kwargs(single_buffer_filters)
        wfilt_spec = pl.BlockSpec((Wh, W), lambda b: (0, 0), **kw)
        hfilt_spec = pl.BlockSpec((tb, H, Hhp), lambda b: (0, 0, 0), **kw)
        return pl.pallas_call(
            _idwt2d_separable_kernel,
            out_shape=jax.ShapeDtypeStruct((B_pad, H, W), dtype),
            grid_spec=pltpu.PrefetchScalarGridSpec(
                num_scalar_prefetch=0,
                grid=(num_blocks,),
                in_specs=[band_spec] * 4 + [wfilt_spec] * 2 + [hfilt_spec] * 2,
                out_specs=out_spec,
            ),
            compiler_params=pltpu.CompilerParams(
                dimension_semantics=("parallel",),
                vmem_limit_bytes=vmem_limit),
        )(*bands, l1t_j, h1t_j, l0tb, h0tb)

    try:
        out = run(True)
    except Exception:       # pl.Buffered(1) unsupported -> default buffering
        out = run(False)

    if B_pad != B:
        out = out[:B]
    return out.reshape(N, C, H, W)


# ----------------------------------------------------------------------------
# Public entry point
# ----------------------------------------------------------------------------
def idwt_2d(LL, LH, HL, HH, wavename="haar", impl=None):
    """Pallas IDWT_2D forward. Inputs NCHW (N, C, H/2, W/2) -> (N, C, H, W)."""
    assert LL.ndim == LH.ndim == HL.ndim == HH.ndim == 4
    if not (LL.shape == LH.shape == HL.shape == HH.shape):
        # TODO(synk): odd H or W gives asymmetric sub-band shapes; unsupported.
        raise NotImplementedError("all four sub-bands must share (N,C,H/2,W/2) "
                                  "(even H and W)")
    N, C, Hh, Wh = LL.shape
    H, W = 2 * Hh, 2 * Wh

    l0, l1, h0, h1 = build_idwt_matrices(H, W, wavename)

    cap = _vmem_capacity_bytes()
    vmem_limit = max(32 * 2**20, min(int(cap * 0.8), 112 * 2**20))

    if impl is None:
        # Small planes: flattened kron path (lane-dense stores, pure 2-D matmuls).
        use_kron = (W < 128) and (H * W <= 1024)
    else:
        use_kron = (impl == "kron")

    if use_kron:
        return _idwt_2d_kron(LL, LH, HL, HH, l0, l1, h0, h1, vmem_limit)
    return _idwt_2d_separable(LL, LH, HL, HH, l0, l1, h0, h1, vmem_limit)


# ----------------------------------------------------------------------------
# Reference (plain JAX, full f32 precision) for validation
# ----------------------------------------------------------------------------
def idwt_2d_reference(LL, LH, HL, HH, wavename="haar"):
    H = LL.shape[-2] + HH.shape[-2]
    W = LL.shape[-1] + HH.shape[-1]
    m_low_0, m_low_1, m_high_0, m_high_1 = build_idwt_matrices(H, W, wavename)
    prec = jax.lax.Precision.HIGHEST
    l0 = jnp.asarray(m_low_0)
    l1 = jnp.asarray(m_low_1)
    h0 = jnp.asarray(m_high_0)
    h1 = jnp.asarray(m_high_1)
    low = (jnp.matmul(LL, l1.T, precision=prec)
           + jnp.matmul(LH, h1.T, precision=prec))
    high = (jnp.matmul(HL, l1.T, precision=prec)
            + jnp.matmul(HH, h1.T, precision=prec))
    return (jnp.matmul(l0.T, low, precision=prec)
            + jnp.matmul(h0.T, high, precision=prec))


if __name__ == "__main__":
    key = jax.random.PRNGKey(0)
    N, C, H, W = 2, 4, 16, 16
    k1, k2, k3, k4 = jax.random.split(key, 4)
    shape = (N, C, H // 2, W // 2)
    LL = jax.random.normal(k1, shape, dtype=jnp.float32)
    LH = jax.random.normal(k2, shape, dtype=jnp.float32)
    HL = jax.random.normal(k3, shape, dtype=jnp.float32)
    HH = jax.random.normal(k4, shape, dtype=jnp.float32)

    ref = jax.block_until_ready(idwt_2d_reference(LL, LH, HL, HH))

    # Default route at this shape: flattened (kron) path.
    out = jax.block_until_ready(idwt_2d(LL, LH, HL, HH))
    assert out.shape == (N, C, H, W)
    err = float(jnp.max(jnp.abs(out - ref)))
    assert jnp.allclose(out, ref, atol=1e-4, rtol=1e-4), err

    # Also exercise the separable (two-stage) path used for larger planes.
    out2 = jax.block_until_ready(idwt_2d(LL, LH, HL, HH, impl="separable"))
    err2 = float(jnp.max(jnp.abs(out2 - ref)))
    assert jnp.allclose(out2, ref, atol=1e-4, rtol=1e-4), err2

    print("KERNEL_OK")
</pallas_src>

<mosaic_0001>
module attributes {stable_mosaic.version = 11 : i64} {
  func.func @_idwt2d_kron_kernel(%arg0: i32, %arg1: memref<8x64xf32, #tpu.memory_space<vmem>>, %arg2: memref<8x64xf32, #tpu.memory_space<vmem>>, %arg3: memref<8x64xf32, #tpu.memory_space<vmem>>, %arg4: memref<8x64xf32, #tpu.memory_space<vmem>>, %arg5: memref<64x256xf32, #tpu.memory_space<vmem>>, %arg6: memref<64x256xf32, #tpu.memory_space<vmem>>, %arg7: memref<64x256xf32, #tpu.memory_space<vmem>>, %arg8: memref<64x256xf32, #tpu.memory_space<vmem>>, %arg9: memref<8x256xf32, #tpu.memory_space<vmem>>) attributes {dimension_semantics = [#tpu.dimension_semantics<parallel>], iteration_bounds = array<i64: 1>, scalar_prefetch = 0 : i64, scratch_operands = 0 : i64, tpu.core_type = #tpu.core_type<tc>, window_params = [{transform_indices = @transform_0, window_bounds = array<i64: 8, 64>}, {transform_indices = @transform_1, window_bounds = array<i64: 8, 64>}, {transform_indices = @transform_2, window_bounds = array<i64: 8, 64>}, {transform_indices = @transform_3, window_bounds = array<i64: 8, 64>}, {pipeline_mode = #tpu.pipeline_mode<synchronous>, transform_indices = @transform_4, window_bounds = array<i64: 64, 256>}, {pipeline_mode = #tpu.pipeline_mode<synchronous>, transform_indices = @transform_5, window_bounds = array<i64: 64, 256>}, {pipeline_mode = #tpu.pipeline_mode<synchronous>, transform_indices = @transform_6, window_bounds = array<i64: 64, 256>}, {pipeline_mode = #tpu.pipeline_mode<synchronous>, transform_indices = @transform_7, window_bounds = array<i64: 64, 256>}, {transform_indices = @transform_8, window_bounds = array<i64: 8, 256>}]} {
    %c0 = arith.constant 0 : index
    %c0_0 = arith.constant 0 : index
    %0 = vector.load %arg1[%c0, %c0_0] : memref<8x64xf32, #tpu.memory_space<vmem>>, vector<8x64xf32>
    %c0_1 = arith.constant 0 : index
    %c0_2 = arith.constant 0 : index
    %1 = vector.load %arg5[%c0_1, %c0_2] : memref<64x256xf32, #tpu.memory_space<vmem>>, vector<64x256xf32>
    %cst = arith.constant dense<0.000000e+00> : vector<8x256xf32>
    %2 = tpu.matmul %0, %1, %cst {dimension_numbers = #tpu.dot_dimension_numbers<[1], [0], [0], [1], [0, 0, 1, 1], [], []>} : vector<8x64xf32>, vector<64x256xf32>, vector<8x256xf32> -> vector<8x256xf32>
    %c0_3 = arith.constant 0 : index
    %c0_4 = arith.constant 0 : index
    %3 = vector.load %arg2[%c0_3, %c0_4] : memref<8x64xf32, #tpu.memory_space<vmem>>, vector<8x64xf32>
    %c0_5 = arith.constant 0 : index
    %c0_6 = arith.constant 0 : index
    %4 = vector.load %arg6[%c0_5, %c0_6] : memref<64x256xf32, #tpu.memory_space<vmem>>, vector<64x256xf32>
    %cst_7 = arith.constant dense<0.000000e+00> : vector<8x256xf32>
    %5 = tpu.matmul %3, %4, %cst_7 {dimension_numbers = #tpu.dot_dimension_numbers<[1], [0], [0], [1], [0, 0, 1, 1], [], []>} : vector<8x64xf32>, vector<64x256xf32>, vector<8x256xf32> -> vector<8x256xf32>
    %6 = arith.addf %2, %5 : vector<8x256xf32>
    %c0_8 = arith.constant 0 : index
    %c0_9 = arith.constant 0 : index
    %7 = vector.load %arg3[%c0_8, %c0_9] : memref<8x64xf32, #tpu.memory_space<vmem>>, vector<8x64xf32>
    %c0_10 = arith.constant 0 : index
    %c0_11 = arith.constant 0 : index
    %8 = vector.load %arg7[%c0_10, %c0_11] : memref<64x256xf32, #tpu.memory_space<vmem>>, vector<64x256xf32>
    %cst_12 = arith.constant dense<0.000000e+00> : vector<8x256xf32>
    %9 = tpu.matmul %7, %8, %cst_12 {dimension_numbers = #tpu.dot_dimension_numbers<[1], [0], [0], [1], [0, 0, 1, 1], [], []>} : vector<8x64xf32>, vector<64x256xf32>, vector<8x256xf32> -> vector<8x256xf32>
    %10 = arith.addf %6, %9 : vector<8x256xf32>
    %c0_13 = arith.constant 0 : index
    %c0_14 = arith.constant 0 : index
    %11 = vector.load %arg4[%c0_13, %c0_14] : memref<8x64xf32, #tpu.memory_space<vmem>>, vector<8x64xf32>
    %c0_15 = arith.constant 0 : index
    %c0_16 = arith.constant 0 : index
    %12 = vector.load %arg8[%c0_15, %c0_16] : memref<64x256xf32, #tpu.memory_space<vmem>>, vector<64x256xf32>
    %cst_17 = arith.constant dense<0.000000e+00> : vector<8x256xf32>
    %13 = tpu.matmul %11, %12, %cst_17 {dimension_numbers = #tpu.dot_dimension_numbers<[1], [0], [0], [1], [0, 0, 1, 1], [], []>} : vector<8x64xf32>, vector<64x256xf32>, vector<8x256xf32> -> vector<8x256xf32>
    %14 = arith.addf %10, %13 : vector<8x256xf32>
    %c0_18 = arith.constant 0 : index
    %c0_19 = arith.constant 0 : index
    %15 = vector.load %arg9[%c0_18, %c0_19] : memref<8x256xf32, #tpu.memory_space<vmem>>, vector<8x256xf32>
    tpu.vector_store %arg9[%c0_18, %c0_19], %14 {strides = array<i32>} : memref<8x256xf32, #tpu.memory_space<vmem>>, vector<8x256xf32>,
    return
  }
  func.func @transform_0(%arg0: i32) -> (i32, i32) {
    %c0_i32 = arith.constant 0 : i32
    %c0_i32_0 = arith.constant 0 : i32
    return %arg0, %c0_i32 : i32, i32
  }
  func.func @transform_1(%arg0: i32) -> (i32, i32) {
    %c0_i32 = arith.constant 0 : i32
    %c0_i32_0 = arith.constant 0 : i32
    return %arg0, %c0_i32 : i32, i32
  }
  func.func @transform_2(%arg0: i32) -> (i32, i32) {
    %c0_i32 = arith.constant 0 : i32
    %c0_i32_0 = arith.constant 0 : i32
    return %arg0, %c0_i32 : i32, i32
  }
  func.func @transform_3(%arg0: i32) -> (i32, i32) {
    %c0_i32 = arith.constant 0 : i32
    %c0_i32_0 = arith.constant 0 : i32
    return %arg0, %c0_i32 : i32, i32
  }
  func.func @transform_4(%arg0: i32) -> (i32, i32) {
    %c0_i32 = arith.constant 0 : i32
    %c0_i32_0 = arith.constant 0 : i32
    %c0_i32_1 = arith.constant 0 : i32
    return %c0_i32, %c0_i32_0 : i32, i32
  }
  func.func @transform_5(%arg0: i32) -> (i32, i32) {
    %c0_i32 = arith.constant 0 : i32
    %c0_i32_0 = arith.constant 0 : i32
    %c0_i32_1 = arith.constant 0 : i32
    return %c0_i32, %c0_i32_0 : i32, i32
  }
  func.func @transform_6(%arg0: i32) -> (i32, i32) {
    %c0_i32 = arith.constant 0 : i32
    %c0_i32_0 = arith.constant 0 : i32
    %c0_i32_1 = arith.constant 0 : i32
    return %c0_i32, %c0_i32_0 : i32, i32
  }
  func.func @transform_7(%arg0: i32) -> (i32, i32) {
    %c0_i32 = arith.constant 0 : i32
    %c0_i32_0 = arith.constant 0 : i32
    %c0_i32_1 = arith.constant 0 : i32
    return %c0_i32, %c0_i32_0 : i32, i32
  }
  func.func @transform_8(%arg0: i32) -> (i32, i32) {
    %c0_i32 = arith.constant 0 : i32
    %c0_i32_0 = arith.constant 0 : i32
    return %arg0, %c0_i32 : i32, i32
  }
}

module attributes {stable_mosaic.version = 11 : i64} {
  func.func @_idwt2d_kron_kernel(%arg0: i32, %arg1: memref<8x64xf32, #tpu.memory_space<vmem>>, %arg2: memref<8x64xf32, #tpu.memory_space<vmem>>, %arg3: memref<8x64xf32, #tpu.memory_space<vmem>>, %arg4: memref<8x64xf32, #tpu.memory_space<vmem>>, %arg5: memref<64x256xf32, #tpu.memory_space<vmem>>, %arg6: memref<64x256xf32, #tpu.memory_space<vmem>>, %arg7: memref<64x256xf32, #tpu.memory_space<vmem>>, %arg8: memref<64x256xf32, #tpu.memory_space<vmem>>, %arg9: memref<8x256xf32, #tpu.memory_space<vmem>>) attributes {dimension_semantics = [#tpu.dimension_semantics<parallel>], iteration_bounds = array<i64: 1>, scalar_prefetch = 0 : i64, scratch_operands = 0 : i64, tpu.core_type = #tpu.core_type<tc>, window_params = [{transform_indices = @transform_0, window_bounds = array<i64: 8, 64>}, {transform_indices = @transform_1, window_bounds = array<i64: 8, 64>}, {transform_indices = @transform_2, window_bounds = array<i64: 8, 64>}, {transform_indices = @transform_3, window_bounds = array<i64: 8, 64>}, {pipeline_mode = #tpu.pipeline_mode<synchronous>, transform_indices = @transform_4, window_bounds = array<i64: 64, 256>}, {pipeline_mode = #tpu.pipeline_mode<synchronous>, transform_indices = @transform_5, window_bounds = array<i64: 64, 256>}, {pipeline_mode = #tpu.pipeline_mode<synchronous>, transform_indices = @transform_6, window_bounds = array<i64: 64, 256>}, {pipeline_mode = #tpu.pipeline_mode<synchronous>, transform_indices = @transform_7, window_bounds = array<i64: 64, 256>}, {transform_indices = @transform_8, window_bounds = array<i64: 8, 256>}]} {
    %c0 = arith.constant 0 : index
    %c0_0 = arith.constant 0 : index
    %0 = vector.load %arg1[%c0, %c0_0] : memref<8x64xf32, #tpu.memory_space<vmem>>, vector<8x64xf32>
    %c0_1 = arith.constant 0 : index
    %c0_2 = arith.constant 0 : index
    %1 = vector.load %arg5[%c0_1, %c0_2] : memref<64x256xf32, #tpu.memory_space<vmem>>, vector<64x256xf32>
    %cst = arith.constant dense<0.000000e+00> : vector<8x256xf32>
    %2 = tpu.matmul %0, %1, %cst {dimension_numbers = #tpu.dot_dimension_numbers<[1], [0], [0], [1], [0, 0, 1, 1], [], []>} : vector<8x64xf32>, vector<64x256xf32>, vector<8x256xf32> -> vector<8x256xf32>
    %c0_3 = arith.constant 0 : index
    %c0_4 = arith.constant 0 : index
    %3 = vector.load %arg2[%c0_3, %c0_4] : memref<8x64xf32, #tpu.memory_space<vmem>>, vector<8x64xf32>
    %c0_5 = arith.constant 0 : index
    %c0_6 = arith.constant 0 : index
    %4 = vector.load %arg6[%c0_5, %c0_6] : memref<64x256xf32, #tpu.memory_space<vmem>>, vector<64x256xf32>
    %cst_7 = arith.constant dense<0.000000e+00> : vector<8x256xf32>
    %5 = tpu.matmul %3, %4, %cst_7 {dimension_numbers = #tpu.dot_dimension_numbers<[1], [0], [0], [1], [0, 0, 1, 1], [], []>} : vector<8x64xf32>, vector<64x256xf32>, vector<8x256xf32> -> vector<8x256xf32>
    %6 = arith.addf %2, %5 : vector<8x256xf32>
    %c0_8 = arith.constant 0 : index
    %c0_9 = arith.constant 0 : index
    %7 = vector.load %arg3[%c0_8, %c0_9] : memref<8x64xf32, #tpu.memory_space<vmem>>, vector<8x64xf32>
    %c0_10 = arith.constant 0 : index
    %c0_11 = arith.constant 0 : index
    %8 = vector.load %arg7[%c0_10, %c0_11] : memref<64x256xf32, #tpu.memory_space<vmem>>, vector<64x256xf32>
    %cst_12 = arith.constant dense<0.000000e+00> : vector<8x256xf32>
    %9 = tpu.matmul %7, %8, %cst_12 {dimension_numbers = #tpu.dot_dimension_numbers<[1], [0], [0], [1], [0, 0, 1, 1], [], []>} : vector<8x64xf32>, vector<64x256xf32>, vector<8x256xf32> -> vector<8x256xf32>
    %10 = arith.addf %6, %9 : vector<8x256xf32>
    %c0_13 = arith.constant 0 : index
    %c0_14 = arith.constant 0 : index
    %11 = vector.load %arg4[%c0_13, %c0_14] : memref<8x64xf32, #tpu.memory_space<vmem>>, vector<8x64xf32>
    %c0_15 = arith.constant 0 : index
    %c0_16 = arith.constant 0 : index
    %12 = vector.load %arg8[%c0_15, %c0_16] : memref<64x256xf32, #tpu.memory_space<vmem>>, vector<64x256xf32>
    %cst_17 = arith.constant dense<0.000000e+00> : vector<8x256xf32>
    %13 = tpu.matmul %11, %12, %cst_17 {dimension_numbers = #tpu.dot_dimension_numbers<[1], [0], [0], [1], [0, 0, 1, 1], [], []>} : vector<8x64xf32>, vector<64x256xf32>, vector<8x256xf32> -> vector<8x256xf32>
    %14 = arith.addf %10, %13 : vector<8x256xf32>
    %c0_18 = arith.constant 0 : index
    %c0_19 = arith.constant 0 : index
    %15 = vector.load %arg9[%c0_18, %c0_19] : memref<8x256xf32, #tpu.memory_space<vmem>>, vector<8x256xf32>
    tpu.vector_store %arg9[%c0_18, %c0_19], %14 {strides = array<i32>} : memref<8x256xf32, #tpu.memory_space<vmem>>, vector<8x256xf32>,
    return
  }
  func.func @transform_0(%arg0: i32) -> (i32, i32) {
    %c0_i32 = arith.constant 0 : i32
    %c0_i32_0 = arith.constant 0 : i32
    return %arg0, %c0_i32 : i32, i32
  }
  func.func @transform_1(%arg0: i32) -> (i32, i32) {
    %c0_i32 = arith.constant 0 : i32
    %c0_i32_0 = arith.constant 0 : i32
    return %arg0, %c0_i32 : i32, i32
  }
  func.func @transform_2(%arg0: i32) -> (i32, i32) {
    %c0_i32 = arith.constant 0 : i32
    %c0_i32_0 = arith.constant 0 : i32
    return %arg0, %c0_i32 : i32, i32
  }
  func.func @transform_3(%arg0: i32) -> (i32, i32) {
    %c0_i32 = arith.constant 0 : i32
    %c0_i32_0 = arith.constant 0 : i32
    return %arg0, %c0_i32 : i32, i32
  }
  func.func @transform_4(%arg0: i32) -> (i32, i32) {
    %c0_i32 = arith.constant 0 : i32
    %c0_i32_0 = arith.constant 0 : i32
    %c0_i32_1 = arith.constant 0 : i32
    return %c0_i32, %c0_i32_0 : i32, i32
  }
  func.func @transform_5(%arg0: i32) -> (i32, i32) {
    %c0_i32 = arith.constant 0 : i32
    %c0_i32_0 = arith.constant 0 : i32
    %c0_i32_1 = arith.constant 0 : i32
    return %c0_i32, %c0_i32_0 : i32, i32
  }
  func.func @transform_6(%arg0: i32) -> (i32, i32) {
    %c0_i32 = arith.constant 0 : i32
    %c0_i32_0 = arith.constant 0 : i32
    %c0_i32_1 = arith.constant 0 : i32
    return %c0_i32, %c0_i32_0 : i32, i32
  }
  func.func @transform_7(%arg0: i32) -> (i32, i32) {
    %c0_i32 = arith.constant 0 : i32
    %c0_i32_0 = arith.constant 0 : i32
    %c0_i32_1 = arith.constant 0 : i32
    return %c0_i32, %c0_i32_0 : i32, i32
  }
  func.func @transform_8(%arg0: i32) -> (i32, i32) {
    %c0_i32 = arith.constant 0 : i32
    %c0_i32_0 = arith.constant 0 : i32
    return %arg0, %c0_i32 : i32, i32
  }
}

</mosaic_0001>

<llo_original>
// kernel: tpu_custom_call.1
$region0: #{tpu_custom_call.1}
  #allocation0 [shape = 'u32[]', space=smem, size = 0x4, offset = 0x4, fixed_abs, tag = 'smem constant byte address 0x4 - core index']
  #allocation1 [shape = 'u32[144,128]{1,0:T(1,128)}', space=vmem, size = 0x12000, scoped, tag = 'internal scratch']
  %s0 = inlined_call_operand.hbm [shape: f32[8,64], index: 0, kind: input, shape index: {}]
  %s1 = inlined_call_operand.hbm [shape: f32[8,64], index: 1, kind: input, shape index: {}]
  %s2 = inlined_call_operand.hbm [shape: f32[8,64], index: 2, kind: input, shape index: {}]
  %s3 = inlined_call_operand.vmem [shape: f32[8,64], index: 3, kind: input, shape index: {}]
  %s4 = inlined_call_operand.hbm [shape: f32[64,256], index: 4, kind: input, shape index: {}]
  %s5 = inlined_call_operand.hbm [shape: f32[64,256], index: 5, kind: input, shape index: {}]
  %s6 = inlined_call_operand.hbm [shape: f32[64,256], index: 6, kind: input, shape index: {}]
  %s7 = inlined_call_operand.hbm [shape: f32[64,256], index: 7, kind: input, shape index: {}]
  %s8 = inlined_call_operand.hbm [shape: f32[8,256], index: 8, kind: output, shape index: {}]
  %s9 = sld [smem:[#allocation0]]
  $region70: #{tpu_custom_call.1} parent=0
    _
  %s11 = ssub.s32 1, %s9
  %s12 = scalar_select 0, %s11, %s9
  $region1: #{tpu_custom_call.1} parent=0
    #allocation2 [shape = 'u8[4096]{0}', space=vmem, size = 0x1000, scoped, tag = 'input window, operand 0, single buffered']
    #allocation3 [shape = 's32[1]{0}', space=sflag, size = 0x4, scoped, tag = 'scoped memory for tpu_custom_call.1']
    #allocation4 [shape = 's32[1]{0}', space=sflag, size = 0x4, scoped, tag = 'scoped memory for tpu_custom_call.1']
    #allocation5 [shape = 'u8[4096]{0}', space=vmem, size = 0x1000, scoped, tag = 'input window, operand 1, single buffered']
    #allocation6 [shape = 's32[1]{0}', space=sflag, size = 0x4, scoped, tag = 'scoped memory for tpu_custom_call.1']
    #allocation7 [shape = 'u8[4096]{0}', space=vmem, size = 0x1000, scoped, tag = 'input window, operand 2, single buffered']
    #allocation8 [shape = 'u8[65536]{0}', space=vmem, size = 0x10000, scoped, tag = 'input window, operand 4, single buffered']
    #allocation9 [shape = 's32[1]{0}', space=sflag, size = 0x4, scoped, tag = 'scoped memory for tpu_custom_call.1']
    #allocation10 [shape = 'u8[65536]{0}', space=vmem, size = 0x10000, scoped, tag = 'input window, operand 5, single buffered']
    #allocation11 [shape = 'u8[65536]{0}', space=vmem, size = 0x10000, scoped, tag = 'input window, operand 6, single buffered']
    #allocation12 [shape = 's32[1]{0}', space=sflag, size = 0x4, scoped, tag = 'scoped memory for tpu_custom_call.1']
    #allocation13 [shape = 'u8[65536]{0}', space=vmem, size = 0x10000, scoped, tag = 'input window, operand 7, single buffered']
    #allocation14 [shape = 'u8[8192]{0}', space=vmem, size = 0x2000, scoped, tag = 'output window, operand 0, single buffered']
    %13 = vsyncpa [#allocation3], 0
    %14 = vsyncpa [#allocation6], 0
    %15 = vsyncpa [#allocation9], 0
    %16 = vsyncpa [#allocation12], 0
    %17 = vsyncpa [#allocation4], 0
    // Predicated region
    $region2: #{tpu_custom_call.1} parent=1 // pred_check
      _
    $region3: #{tpu_custom_call.1} parent=1 // pred_check_branch
      %19 = sbr.rel (0) target = $region5
    $region4: #{tpu_custom_call.1} parent=1 // pred_region
      %s21 = ssub.s32 128, 128
      %22 = vsyncadd [#allocation3], %s21
      %s24 = sshll.u32 [#allocation2], 4
      %s25 = int_to_ptr.vmem [resolvable:$true] %s24
      %27 = dma.hbm_to_vmem [thread:$0]  %s0, 128, %s25, [#allocation3]
    $region5: #{tpu_custom_call.1} parent=1 // pred_fallthru
      _
    // Predicated region
    $region6: #{tpu_custom_call.1} parent=1 // pred_check
      _
    $region7: #{tpu_custom_call.1} parent=1 // pred_check_branch
      %29 = sbr.rel (0) target = $region9
    $region8: #{tpu_custom_call.1} parent=1 // pred_region
      %s31 = ssub.s32 128, 128
      %32 = vsyncadd [#allocation6], %s31
      %s34 = sshll.u32 [#allocation5], 4
      %s35 = int_to_ptr.vmem [resolvable:$true] %s34
      %37 = dma.hbm_to_vmem [thread:$0]  %s1, 128, %s35, [#allocation6]
    $region9: #{tpu_custom_call.1} parent=1 // pred_fallthru
      _
    // Predicated region
    $region10: #{tpu_custom_call.1} parent=1 // pred_check
      _
    $region11: #{tpu_custom_call.1} parent=1 // pred_check_branch
      %39 = sbr.rel (0) target = $region13
    $region12: #{tpu_custom_call.1} parent=1 // pred_region
      %s41 = ssub.s32 128, 128
      %42 = vsyncadd [#allocation6], %s41
      %s44 = sshll.u32 [#allocation7], 4
      %s45 = int_to_ptr.vmem [resolvable:$true] %s44
      %47 = dma.hbm_to_vmem [thread:$0]  %s2, 128, %s45, [#allocation6]
    $region13: #{tpu_custom_call.1} parent=1 // pred_fallthru
      _
    // Predicated region
    $region14: #{tpu_custom_call.1} parent=1 // pred_check
      _
    $region15: #{tpu_custom_call.1} parent=1 // pred_check_branch
      %49 = sbr.rel (0) target = $region17
    $region16: #{tpu_custom_call.1} parent=1 // pred_region
      _
    $region17: #{tpu_custom_call.1} parent=1 // pred_fallthru
      _
    // Predicated region
    $region18: #{tpu_custom_call.1} parent=1 // pred_check
      _
    $region19: #{tpu_custom_call.1} parent=1 // pred_check_branch
      %51 = sbr.rel (0) target = $region21
    $region20: #{tpu_custom_call.1} parent=1 // pred_region
      %s53 = ssub.s32 2048, 2048
      %54 = vsyncadd [#allocation9], %s53
      %s55 = sshll.u32 [#allocation8], 4
      %s56 = int_to_ptr.vmem [resolvable:$true] %s55
      %61 = dma.hbm_to_vmem [thread:$0]  %s4, 2048, %s56, [#allocation9], 256, 256, 16
    $region21: #{tpu_custom_call.1} parent=1 // pred_fallthru
      _
    // Predicated region
    $region22: #{tpu_custom_call.1} parent=1 // pred_check
      _
    $region23: #{tpu_custom_call.1} parent=1 // pred_check_branch
      %63 = sbr.rel (0) target = $region25
    $region24: #{tpu_custom_call.1} parent=1 // pred_region
      %s65 = ssub.s32 2048, 2048
      %66 = vsyncadd [#allocation9], %s65
      %s67 = sshll.u32 [#allocation10], 4
      %s68 = int_to_ptr.vmem [resolvable:$true] %s67
      %73 = dma.hbm_to_vmem [thread:$0]  %s5, 2048, %s68, [#allocation9], 256, 256, 16
    $region25: #{tpu_custom_call.1} parent=1 // pred_fallthru
      _
    // Predicated region
    $region26: #{tpu_custom_call.1} parent=1 // pred_check
      _
    $region27: #{tpu_custom_call.1} parent=1 // pred_check_branch
      %75 = sbr.rel (0) target = $region29
    $region28: #{tpu_custom_call.1} parent=1 // pred_region
      %s77 = ssub.s32 2048, 2048
      %78 = vsyncadd [#allocation12], %s77
      %s79 = sshll.u32 [#allocation11], 4
      %s80 = int_to_ptr.vmem [resolvable:$true] %s79
      %85 = dma.hbm_to_vmem [thread:$0]  %s6, 2048, %s80, [#allocation12], 256, 256, 16
    $region29: #{tpu_custom_call.1} parent=1 // pred_fallthru
      _
    // Predicated region
    $region30: #{tpu_custom_call.1} parent=1 // pred_check
      _
    $region31: #{tpu_custom_call.1} parent=1 // pred_check_branch
      %87 = sbr.rel (0) target = $region33
    $region32: #{tpu_custom_call.1} parent=1 // pred_region
      %s89 = ssub.s32 2048, 2048
      %90 = vsyncadd [#allocation12], %s89
      %s91 = sshll.u32 [#allocation13], 4
      %s92 = int_to_ptr.vmem [resolvable:$true] %s91
      %97 = dma.hbm_to_vmem [thread:$0]  %s7, 2048, %s92, [#allocation12], 256, 256, 16
    $region33: #{tpu_custom_call.1} parent=1 // pred_fallthru
      _
    // Predicated region
    $region34: #{tpu_custom_call.1} parent=1 // pred_check
      _
    $region35: #{tpu_custom_call.1} parent=1 // pred_check_branch
      %99 = sbr.rel (0) target = $region37
    $region36: #{tpu_custom_call.1} parent=1 // pred_region
      %100 = dma.done [#allocation3], 128
    $region37: #{tpu_custom_call.1} parent=1 // pred_fallthru
      _
    // Predicated region
    $region38: #{tpu_custom_call.1} parent=1 // pred_check
      _
    $region39: #{tpu_custom_call.1} parent=1 // pred_check_branch
      %102 = sbr.rel (0) target = $region41
    $region40: #{tpu_custom_call.1} parent=1 // pred_region
      %103 = dma.done [#allocation6], 128
    $region41: #{tpu_custom_call.1} parent=1 // pred_fallthru
      _
    // Predicated region
    $region42: #{tpu_custom_call.1} parent=1 // pred_check
      _
    $region43: #{tpu_custom_call.1} parent=1 // pred_check_branch
      %105 = sbr.rel (0) target = $region45
    $region44: #{tpu_custom_call.1} parent=1 // pred_region
      %106 = dma.done [#allocation6], 128
    $region45: #{tpu_custom_call.1} parent=1 // pred_fallthru
      _
    // Predicated region
    $region46: #{tpu_custom_call.1} parent=1 // pred_check
      _
    $region47: #{tpu_custom_call.1} parent=1 // pred_check_branch
      %108 = sbr.rel (0) target = $region49
    $region48: #{tpu_custom_call.1} parent=1 // pred_region
      %109 = dma.done [#allocation9], 2048
    $region49: #{tpu_custom_call.1} parent=1 // pred_fallthru
      _
    // Predicated region
    $region50: #{tpu_custom_call.1} parent=1 // pred_check
      _
    $region51: #{tpu_custom_call.1} parent=1 // pred_check_branch
      %111 = sbr.rel (0) target = $region53
    $region52: #{tpu_custom_call.1} parent=1 // pred_region
      %112 = dma.done [#allocation9], 2048
    $region53: #{tpu_custom_call.1} parent=1 // pred_fallthru
      _
    // Predicated region
    $region54: #{tpu_custom_call.1} parent=1 // pred_check
      _
    $region55: #{tpu_custom_call.1} parent=1 // pred_check_branch
      %114 = sbr.rel (0) target = $region57
    $region56: #{tpu_custom_call.1} parent=1 // pred_region
      %115 = dma.done [#allocation12], 2048
    $region57: #{tpu_custom_call.1} parent=1 // pred_fallthru
      _
    // Predicated region
    $region58: #{tpu_custom_call.1} parent=1 // pred_check
      _
    $region59: #{tpu_custom_call.1} parent=1 // pred_check_branch
      %117 = sbr.rel (0) target = $region61
    $region60: #{tpu_custom_call.1} parent=1 // pred_region
      %118 = dma.done [#allocation12], 2048
    $region61: #{tpu_custom_call.1} parent=1 // pred_fallthru
      _
    %v119 = vld [vmem:[#allocation2] sm:$0xff]
    %v120 = vld [vmem:[#allocation8] sm:$0xff]
    %v121 = vld [vmem:[#allocation8 + $0x8] sm:$0xff]
    %v122 = vld [vmem:[#allocation8 + $0x10] sm:$0xff]
    %v123 = vld [vmem:[#allocation8 + $0x18] sm:$0xff]
    %v124 = vld [vmem:[#allocation8 + $0x20] sm:$0xff]
    %v125 = vld [vmem:[#allocation8 + $0x28] sm:$0xff]
    %v126 = vld [vmem:[#allocation8 + $0x30] sm:$0xff]
    %v127 = vld [vmem:[#allocation8 + $0x38] sm:$0xff]
    %v128 = vld [vmem:[#allocation8 + $0x40] sm:$0xff]
    %v129 = vld [vmem:[#allocation8 + $0x48] sm:$0xff]
    %v130 = vld [vmem:[#allocation8 + $0x50] sm:$0xff]
    %v131 = vld [vmem:[#allocation8 + $0x58] sm:$0xff]
    %v132 = vld [vmem:[#allocation8 + $0x60] sm:$0xff]
    %v133 = vld [vmem:[#allocation8 + $0x68] sm:$0xff]
    %v134 = vld [vmem:[#allocation8 + $0x70] sm:$0xff]
    %v135 = vld [vmem:[#allocation8 + $0x78] sm:$0xff]
    %v136 = vld [vmem:[#allocation5] sm:$0xff]
    %v137 = vld [vmem:[#allocation10] sm:$0xff]
    %v138 = vld [vmem:[#allocation10 + $0x8] sm:$0xff]
    %v139 = vld [vmem:[#allocation10 + $0x10] sm:$0xff]
    %v140 = vld [vmem:[#allocation10 + $0x18] sm:$0xff]
    %v141 = vld [vmem:[#allocation10 + $0x20] sm:$0xff]
    %v142 = vld [vmem:[#allocation10 + $0x28] sm:$0xff]
    %v143 = vld [vmem:[#allocation10 + $0x30] sm:$0xff]
    %v144 = vld [vmem:[#allocation10 + $0x38] sm:$0xff]
    %v145 = vld [vmem:[#allocation10 + $0x40] sm:$0xff]
    %v146 = vld [vmem:[#allocation10 + $0x48] sm:$0xff]
    %v147 = vld [vmem:[#allocation10 + $0x50] sm:$0xff]
    %v148 = vld [vmem:[#allocation10 + $0x58] sm:$0xff]
    %v149 = vld [vmem:[#allocation10 + $0x60] sm:$0xff]
    %v150 = vld [vmem:[#allocation10 + $0x68] sm:$0xff]
    %v151 = vld [vmem:[#allocation10 + $0x70] sm:$0xff]
    %v152 = vld [vmem:[#allocation10 + $0x78] sm:$0xff]
    %vm153 = vcmask 523264
    %v155 = vsel %vm153, %v136, 0
    %157 = vmatprep.subr.mxu0 %v138
    %158 = vmatpush1.msra.mxu0 %v137
    %159 = vmatprep.subr.mxu0 %v140
    %160 = vmatpush1.msra.mxu0 %v139
    %161 = vmatprep.subr.mxu0 %v142
    %162 = vmatpush1.msra.mxu0 %v141
    %163 = vmatprep.subr.mxu0 %v144
    %164 = vmatpush1.msra.mxu0 %v143
    %165 = vmatprep.subr.mxu0 %v146
    %166 = vmatpush1.msra.mxu0 %v145
    %167 = vmatprep.subr.mxu0 %v148
    %168 = vmatpush1.msra.mxu0 %v147
    %169 = vmatprep.subr.mxu0 %v150
    %170 = vmatpush1.msra.mxu0 %v149
    %171 = vmatprep.subr.mxu0 %v152
    %172 = vmatpush1.msra.mxu0 %v151
    %173 = vmatprep.subr.mxu0 0.0
    %174 = vmatpush1.msra.mxu0 0.0
    %175 = vmatprep.subr.mxu0 0.0
    %176 = vmatpush1.msra.mxu0 0.0
    %177 = vmatprep.subr.mxu0 0.0
    %178 = vmatpush1.msra.mxu0 0.0
    %179 = vmatprep.subr.mxu0 0.0
    %180 = vmatpush1.msra.mxu0 0.0
    %181 = vmatprep.subr.mxu0 0.0
    %182 = vmatpush1.msra.mxu0 0.0
    %183 = vmatprep.subr.mxu0 0.0
    %184 = vmatpush1.msra.mxu0 0.0
    %185 = vmatprep.subr.mxu0 0.0
    %186 = vmatpush1.msra.mxu0 0.0
    %187 = vmatprep.subr.mxu0 0.0
    %188 = vmatpush1.msra.mxu0 0.0
    %189 = vmatprep.subr.mxu0 0.0
    %190 = vmatpush1.msra.mxu0 0.0
    %191 = vmatprep.subr.mxu0 0.0
    %192 = vmatpush1.msra.mxu0 0.0
    %193 = vmatprep.subr.mxu0 0.0
    %194 = vmatpush1.msra.mxu0 0.0
    %195 = vmatprep.subr.mxu0 0.0
    %196 = vmatpush1.msra.mxu0 0.0
    %197 = vmatprep.subr.mxu0 0.0
    %198 = vmatpush1.msra.mxu0 0.0
    %199 = vmatprep.subr.mxu0 0.0
    %200 = vmatpush1.msra.mxu0 0.0
    %201 = vmatprep.subr.mxu0 0.0
    %202 = vmatpush1.msra.mxu0 0.0
    %203 = vmatprep.subr.mxu0 0.0
    %204 = vmatpush1.msra.mxu0 0.0
    %205 = vmatprep.subr.mxu0 0.0
    %206 = vmatpush1.msra.mxu0 0.0
    %207 = vmatprep.subr.mxu0 0.0
    %208 = vmatpush1.msra.mxu0 0.0
    %209 = vmatprep.subr.mxu0 0.0
    %210 = vmatpush1.msra.mxu0 0.0
    %211 = vmatprep.subr.mxu0 0.0
    %212 = vmatpush1.msra.mxu0 0.0
    %213 = vmatprep.subr.mxu0 0.0
    %214 = vmatpush1.msra.mxu0 0.0
    %215 = vmatprep.subr.mxu0 0.0
    %216 = vmatpush1.msra.mxu0 0.0
    %217 = vmatprep.subr.mxu0 0.0
    %218 = vmatpush1.msra.mxu0 0.0
    %219 = vmatprep.subr.mxu0 0.0
    %220 = vmatpush1.msra.mxu0 0.0
    %221 = vmatprep.mubr.f32.mxu0 0.0
    %222 = vmatmul.mubr.f32.gmra.mrb[0].mxu0 %v155
    %v223 = vpop.f32.mrb[0].mxu0
    %v224 = vadd.f32 0.0, %v223
    %v225 = vpop.f32.mrb[0].mxu0
    %v226 = vadd.f32 0.0, %v225
    %227 = vdwg.mxu0
    %v229 = vsel %vm153, %v119, 0
    %231 = vmatprep.subr.mxu0 %v121
    %232 = vmatpush1.msra.mxu0 %v120
    %233 = vmatprep.subr.mxu0 %v123
    %234 = vmatpush1.msra.mxu0 %v122
    %235 = vmatprep.subr.mxu0 %v125
    %236 = vmatpush1.msra.mxu0 %v124
    %237 = vmatprep.subr.mxu0 %v127
    %238 = vmatpush1.msra.mxu0 %v126
    %239 = vmatprep.subr.mxu0 %v129
    %240 = vmatpush1.msra.mxu0 %v128
    %241 = vmatprep.subr.mxu0 %v131
    %242 = vmatpush1.msra.mxu0 %v130
    %243 = vmatprep.subr.mxu0 %v133
    %244 = vmatpush1.msra.mxu0 %v132
    %245 = vmatprep.subr.mxu0 %v135
    %246 = vmatpush1.msra.mxu0 %v134
    %247 = vmatprep.subr.mxu0 0.0
    %248 = vmatpush1.msra.mxu0 0.0
    %249 = vmatprep.subr.mxu0 0.0
    %250 = vmatpush1.msra.mxu0 0.0
    %251 = vmatprep.subr.mxu0 0.0
    %252 = vmatpush1.msra.mxu0 0.0
    %253 = vmatprep.subr.mxu0 0.0
    %254 = vmatpush1.msra.mxu0 0.0
    %255 = vmatprep.subr.mxu0 0.0
    %256 = vmatpush1.msra.mxu0 0.0
    %257 = vmatprep.subr.mxu0 0.0
    %258 = vmatpush1.msra.mxu0 0.0
    %259 = vmatprep.subr.mxu0 0.0
    %260 = vmatpush1.msra.mxu0 0.0
    %261 = vmatprep.subr.mxu0 0.0
    %262 = vmatpush1.msra.mxu0 0.0
    %263 = vmatprep.subr.mxu0 0.0
    %264 = vmatpush1.msra.mxu0 0.0
    %265 = vmatprep.subr.mxu0 0.0
    %266 = vmatpush1.msra.mxu0 0.0
    %267 = vmatprep.subr.mxu0 0.0
    %268 = vmatpush1.msra.mxu0 0.0
    %269 = vmatprep.subr.mxu0 0.0
    %270 = vmatpush1.msra.mxu0 0.0
    %271 = vmatprep.subr.mxu0 0.0
    %272 = vmatpush1.msra.mxu0 0.0
    %273 = vmatprep.subr.mxu0 0.0
    %274 = vmatpush1.msra.mxu0 0.0
    %275 = vmatprep.subr.mxu0 0.0
    %276 = vmatpush1.msra.mxu0 0.0
    %277 = vmatprep.subr.mxu0 0.0
    %278 = vmatpush1.msra.mxu0 0.0
    %279 = vmatprep.subr.mxu0 0.0
    %280 = vmatpush1.msra.mxu0 0.0
    %281 = vmatprep.subr.mxu0 0.0
    %282 = vmatpush1.msra.mxu0 0.0
    %283 = vmatprep.subr.mxu0 0.0
    %284 = vmatpush1.msra.mxu0 0.0
    %285 = vmatprep.subr.mxu0 0.0
    %286 = vmatpush1.msra.mxu0 0.0
    %287 = vmatprep.subr.mxu0 0.0
    %288 = vmatpush1.msra.mxu0 0.0
    %289 = vmatprep.subr.mxu0 0.0
    %290 = vmatpush1.msra.mxu0 0.0
    %291 = vmatprep.subr.mxu0 0.0
    %292 = vmatpush1.msra.mxu0 0.0
    %293 = vmatprep.subr.mxu0 0.0
    %294 = vmatpush1.msra.mxu0 0.0
    %295 = vmatprep.mubr.f32.mxu0 0.0
    %296 = vmatmul.mubr.f32.gmra.mrb[0].mxu0 %v229
    %v297 = vpop.f32.mrb[0].mxu0
    %v298 = vadd.f32 %v224, %v297
    %v299 = vpop.f32.mrb[0].mxu0
    %v300 = vadd.f32 %v226, %v299
    %301 = vdwg.mxu0
    %v302 = vld [vmem:[#allocation7] sm:$0xff]
    %v303 = vld [vmem:[#allocation11] sm:$0xff]
    %v304 = vld [vmem:[#allocation11 + $0x8] sm:$0xff]
    %v305 = vld [vmem:[#allocation11 + $0x10] sm:$0xff]
    %v306 = vld [vmem:[#allocation11 + $0x18] sm:$0xff]
    %v307 = vld [vmem:[#allocation11 + $0x20] sm:$0xff]
    %v308 = vld [vmem:[#allocation11 + $0x28] sm:$0xff]
    %v309 = vld [vmem:[#allocation11 + $0x30] sm:$0xff]
    %v310 = vld [vmem:[#allocation11 + $0x38] sm:$0xff]
    %v311 = vld [vmem:[#allocation11 + $0x40] sm:$0xff]
    %v312 = vld [vmem:[#allocation11 + $0x48] sm:$0xff]
    %v313 = vld [vmem:[#allocation11 + $0x50] sm:$0xff]
    %v314 = vld [vmem:[#allocation11 + $0x58] sm:$0xff]
    %v315 = vld [vmem:[#allocation11 + $0x60] sm:$0xff]
    %v316 = vld [vmem:[#allocation11 + $0x68] sm:$0xff]
    %v317 = vld [vmem:[#allocation11 + $0x70] sm:$0xff]
    %v318 = vld [vmem:[#allocation11 + $0x78] sm:$0xff]
    %v320 = vsel %vm153, %v302, 0
    %322 = vmatprep.subr.mxu0 %v304
    %323 = vmatpush1.msra.mxu0 %v303
    %324 = vmatprep.subr.mxu0 %v306
    %325 = vmatpush1.msra.mxu0 %v305
    %326 = vmatprep.subr.mxu0 %v308
    %327 = vmatpush1.msra.mxu0 %v307
    %328 = vmatprep.subr.mxu0 %v310
    %329 = vmatpush1.msra.mxu0 %v309
    %330 = vmatprep.subr.mxu0 %v312
    %331 = vmatpush1.msra.mxu0 %v311
    %332 = vmatprep.subr.mxu0 %v314
    %333 = vmatpush1.msra.mxu0 %v313
    %334 = vmatprep.subr.mxu0 %v316
    %335 = vmatpush1.msra.mxu0 %v315
    %336 = vmatprep.subr.mxu0 %v318
    %337 = vmatpush1.msra.mxu0 %v317
    %338 = vmatprep.subr.mxu0 0.0
    %339 = vmatpush1.msra.mxu0 0.0
    %340 = vmatprep.subr.mxu0 0.0
    %341 = vmatpush1.msra.mxu0 0.0
    %342 = vmatprep.subr.mxu0 0.0
    %343 = vmatpush1.msra.mxu0 0.0
    %344 = vmatprep.subr.mxu0 0.0
    %345 = vmatpush1.msra.mxu0 0.0
    %346 = vmatprep.subr.mxu0 0.0
    %347 = vmatpush1.msra.mxu0 0.0
    %348 = vmatprep.subr.mxu0 0.0
    %349 = vmatpush1.msra.mxu0 0.0
    %350 = vmatprep.subr.mxu0 0.0
    %351 = vmatpush1.msra.mxu0 0.0
    %352 = vmatprep.subr.mxu0 0.0
    %353 = vmatpush1.msra.mxu0 0.0
    %354 = vmatprep.subr.mxu0 0.0
    %355 = vmatpush1.msra.mxu0 0.0
    %356 = vmatprep.subr.mxu0 0.0
    %357 = vmatpush1.msra.mxu0 0.0
    %358 = vmatprep.subr.mxu0 0.0
    %359 = vmatpush1.msra.mxu0 0.0
    %360 = vmatprep.subr.mxu0 0.0
    %361 = vmatpush1.msra.mxu0 0.0
    %362 = vmatprep.subr.mxu0 0.0
    %363 = vmatpush1.msra.mxu0 0.0
    %364 = vmatprep.subr.mxu0 0.0
    %365 = vmatpush1.msra.mxu0 0.0
    %366 = vmatprep.subr.mxu0 0.0
    %367 = vmatpush1.msra.mxu0 0.0
    %368 = vmatprep.subr.mxu0 0.0
    %369 = vmatpush1.msra.mxu0 0.0
    %370 = vmatprep.subr.mxu0 0.0
    %371 = vmatpush1.msra.mxu0 0.0
    %372 = vmatprep.subr.mxu0 0.0
    %373 = vmatpush1.msra.mxu0 0.0
    %374 = vmatprep.subr.mxu0 0.0
    %375 = vmatpush1.msra.mxu0 0.0
    %376 = vmatprep.subr.mxu0 0.0
    %377 = vmatpush1.msra.mxu0 0.0
    %378 = vmatprep.subr.mxu0 0.0
    %379 = vmatpush1.msra.mxu0 0.0
    %380 = vmatprep.subr.mxu0 0.0
    %381 = vmatpush1.msra.mxu0 0.0
    %382 = vmatprep.subr.mxu0 0.0
    %383 = vmatpush1.msra.mxu0 0.0
    %384 = vmatprep.subr.mxu0 0.0
    %385 = vmatpush1.msra.mxu0 0.0
    %386 = vmatprep.mubr.f32.mxu0 0.0
    %387 = vmatmul.mubr.f32.gmra.mrb[0].mxu0 %v320
    %v388 = vpop.f32.mrb[0].mxu0
    %v389 = vadd.f32 0.0, %v388
    %v390 = vpop.f32.mrb[0].mxu0
    %v391 = vadd.f32 0.0, %v390
    %392 = vdwg.mxu0
    %v393 = vadd.f32 %v298, %v389
    %v394 = vadd.f32 %v300, %v391
    %v395 = vld [vmem:[%s3] sm:$0xff]
    %v396 = vld [vmem:[#allocation13] sm:$0xff]
    %v397 = vld [vmem:[#allocation13 + $0x8] sm:$0xff]
    %v398 = vld [vmem:[#allocation13 + $0x10] sm:$0xff]
    %v399 = vld [vmem:[#allocation13 + $0x18] sm:$0xff]
    %v400 = vld [vmem:[#allocation13 + $0x20] sm:$0xff]
    %v401 = vld [vmem:[#allocation13 + $0x28] sm:$0xff]
    %v402 = vld [vmem:[#allocation13 + $0x30] sm:$0xff]
    %v403 = vld [vmem:[#allocation13 + $0x38] sm:$0xff]
    %v404 = vld [vmem:[#allocation13 + $0x40] sm:$0xff]
    %v405 = vld [vmem:[#allocation13 + $0x48] sm:$0xff]
    %v406 = vld [vmem:[#allocation13 + $0x50] sm:$0xff]
    %v407 = vld [vmem:[#allocation13 + $0x58] sm:$0xff]
    %v408 = vld [vmem:[#allocation13 + $0x60] sm:$0xff]
    %v409 = vld [vmem:[#allocation13 + $0x68] sm:$0xff]
    %v410 = vld [vmem:[#allocation13 + $0x70] sm:$0xff]
    %v411 = vld [vmem:[#allocation13 + $0x78] sm:$0xff]
    %v413 = vsel %vm153, %v395, 0
    %415 = vmatprep.subr.mxu0 %v397
    %416 = vmatpush1.msra.mxu0 %v396
    %417 = vmatprep.subr.mxu0 %v399
    %418 = vmatpush1.msra.mxu0 %v398
    %419 = vmatprep.subr.mxu0 %v401
    %420 = vmatpush1.msra.mxu0 %v400
    %421 = vmatprep.subr.mxu0 %v403
    %422 = vmatpush1.msra.mxu0 %v402
    %423 = vmatprep.subr.mxu0 %v405
    %424 = vmatpush1.msra.mxu0 %v404
    %425 = vmatprep.subr.mxu0 %v407
    %426 = vmatpush1.msra.mxu0 %v406
    %427 = vmatprep.subr.mxu0 %v409
    %428 = vmatpush1.msra.mxu0 %v408
    %429 = vmatprep.subr.mxu0 %v411
    %430 = vmatpush1.msra.mxu0 %v410
    %431 = vmatprep.subr.mxu0 0.0
    %432 = vmatpush1.msra.mxu0 0.0
    %433 = vmatprep.subr.mxu0 0.0
    %434 = vmatpush1.msra.mxu0 0.0
    %435 = vmatprep.subr.mxu0 0.0
    %436 = vmatpush1.msra.mxu0 0.0
    %437 = vmatprep.subr.mxu0 0.0
    %438 = vmatpush1.msra.mxu0 0.0
    %439 = vmatprep.subr.mxu0 0.0
    %440 = vmatpush1.msra.mxu0 0.0
    %441 = vmatprep.subr.mxu0 0.0
    %442 = vmatpush1.msra.mxu0 0.0
    %443 = vmatprep.subr.mxu0 0.0
    %444 = vmatpush1.msra.mxu0 0.0
    %445 = vmatprep.subr.mxu0 0.0
    %446 = vmatpush1.msra.mxu0 0.0
    %447 = vmatprep.subr.mxu0 0.0
    %448 = vmatpush1.msra.mxu0 0.0
    %449 = vmatprep.subr.mxu0 0.0
    %450 = vmatpush1.msra.mxu0 0.0
    %451 = vmatprep.subr.mxu0 0.0
    %452 = vmatpush1.msra.mxu0 0.0
    %453 = vmatprep.subr.mxu0 0.0
    %454 = vmatpush1.msra.mxu0 0.0
    %455 = vmatprep.subr.mxu0 0.0
    %456 = vmatpush1.msra.mxu0 0.0
    %457 = vmatprep.subr.mxu0 0.0
    %458 = vmatpush1.msra.mxu0 0.0
    %459 = vmatprep.subr.mxu0 0.0
    %460 = vmatpush1.msra.mxu0 0.0
    %461 = vmatprep.subr.mxu0 0.0
    %462 = vmatpush1.msra.mxu0 0.0
    %463 = vmatprep.subr.mxu0 0.0
    %464 = vmatpush1.msra.mxu0 0.0
    %465 = vmatprep.subr.mxu0 0.0
    %466 = vmatpush1.msra.mxu0 0.0
    %467 = vmatprep.subr.mxu0 0.0
    %468 = vmatpush1.msra.mxu0 0.0
    %469 = vmatprep.subr.mxu0 0.0
    %470 = vmatpush1.msra.mxu0 0.0
    %471 = vmatprep.subr.mxu0 0.0
    %472 = vmatpush1.msra.mxu0 0.0
    %473 = vmatprep.subr.mxu0 0.0
    %474 = vmatpush1.msra.mxu0 0.0
    %475 = vmatprep.subr.mxu0 0.0
    %476 = vmatpush1.msra.mxu0 0.0
    %477 = vmatprep.subr.mxu0 0.0
    %478 = vmatpush1.msra.mxu0 0.0
    %479 = vmatprep.mubr.f32.mxu0 0.0
    %480 = vmatmul.mubr.f32.gmra.mrb[0].mxu0 %v413
    %v481 = vpop.f32.mrb[0].mxu0
    %v482 = vadd.f32 0.0, %v481
    %v483 = vpop.f32.mrb[0].mxu0
    %v484 = vadd.f32 0.0, %v483
    %485 = vdwg.mxu0
    %v486 = vadd.f32 %v393, %v482
    %v487 = vadd.f32 %v394, %v484
    %488 = vst [vmem:[#allocation14] sm:$0xff] %v486
    %489 = vst [vmem:[#allocation14 + $0x8] sm:$0xff] %v487
    // Predicated region
    $region62: #{tpu_custom_call.1} parent=1 // pred_check
      _
    $region63: #{tpu_custom_call.1} parent=1 // pred_check_branch
      %491 = sbr.rel (0) target = $region65
    $region64: #{tpu_custom_call.1} parent=1 // pred_region
      %s493 = ssub.s32 256, 256
      %494 = vsyncadd [#allocation4], %s493
      %s496 = sshll.u32 [#allocation14], 4
      %s497 = int_to_ptr.vmem [resolvable:$true] %s496
      %499 = dma.vmem_to_hbm [thread:$0]  %s497, 256, %s8, [#allocation4]
    $region65: #{tpu_custom_call.1} parent=1 // pred_fallthru
      _
    // Predicated region
    $region66: #{tpu_custom_call.1} parent=1 // pred_check
      _
    $region67: #{tpu_custom_call.1} parent=1 // pred_check_branch
      %501 = sbr.rel (0) target = $region69
    $region68: #{tpu_custom_call.1} parent=1 // pred_region
      %502 = dma.done [#allocation4], 256
    $region69: #{tpu_custom_call.1} parent=1 // pred_fallthru
      _
    %503 = vsyncpa [#allocation3], 1
    %504 = vsyncpa [#allocation6], 1
    %505 = vsyncpa [#allocation9], 1
    %506 = vsyncpa [#allocation12], 1
    %507 = vsyncpa [#allocation4], 1

// kernel: tpu_custom_call.1
$region0: #{tpu_custom_call.1}
  #allocation0 [shape = 'u32[]', space=smem, size = 0x4, offset = 0x4, fixed_abs, tag = 'smem constant byte address 0x4 - core index']
  #allocation1 [shape = 'u32[144,128]{1,0:T(1,128)}', space=vmem, size = 0x12000, scoped, tag = 'internal scratch']
  %s0 = inlined_call_operand.hbm [shape: f32[8,64], index: 0, kind: input, shape index: {}]
  %s1 = inlined_call_operand.hbm [shape: f32[8,64], index: 1, kind: input, shape index: {}]
  %s2 = inlined_call_operand.hbm [shape: f32[8,64], index: 2, kind: input, shape index: {}]
  %s3 = inlined_call_operand.vmem [shape: f32[8,64], index: 3, kind: input, shape index: {}]
  %s4 = inlined_call_operand.hbm [shape: f32[64,256], index: 4, kind: input, shape index: {}]
  %s5 = inlined_call_operand.hbm [shape: f32[64,256], index: 5, kind: input, shape index: {}]
  %s6 = inlined_call_operand.hbm [shape: f32[64,256], index: 6, kind: input, shape index: {}]
  %s7 = inlined_call_operand.hbm [shape: f32[64,256], index: 7, kind: input, shape index: {}]
  %s8 = inlined_call_operand.hbm [shape: f32[8,256], index: 8, kind: output, shape index: {}]
  %s9 = sld [smem:[#allocation0]]
  $region70: #{tpu_custom_call.1} parent=0
    _
  %s11 = ssub.s32 1, %s9
  %s12 = scalar_select 0, %s11, %s9
  $region1: #{tpu_custom_call.1} parent=0
    #allocation2 [shape = 'u8[4096]{0}', space=vmem, size = 0x1000, scoped, tag = 'input window, operand 0, single buffered']
    #allocation3 [shape = 's32[1]{0}', space=sflag, size = 0x4, scoped, tag = 'scoped memory for tpu_custom_call.1']
    #allocation4 [shape = 's32[1]{0}', space=sflag, size = 0x4, scoped, tag = 'scoped memory for tpu_custom_call.1']
    #allocation5 [shape = 'u8[4096]{0}', space=vmem, size = 0x1000, scoped, tag = 'input window, operand 1, single buffered']
    #allocation6 [shape = 's32[1]{0}', space=sflag, size = 0x4, scoped, tag = 'scoped memory for tpu_custom_call.1']
    #allocation7 [shape = 'u8[4096]{0}', space=vmem, size = 0x1000, scoped, tag = 'input window, operand 2, single buffered']
    #allocation8 [shape = 'u8[65536]{0}', space=vmem, size = 0x10000, scoped, tag = 'input window, operand 4, single buffered']
    #allocation9 [shape = 's32[1]{0}', space=sflag, size = 0x4, scoped, tag = 'scoped memory for tpu_custom_call.1']
    #allocation10 [shape = 'u8[65536]{0}', space=vmem, size = 0x10000, scoped, tag = 'input window, operand 5, single buffered']
    #allocation11 [shape = 'u8[65536]{0}', space=vmem, size = 0x10000, scoped, tag = 'input window, operand 6, single buffered']
    #allocation12 [shape = 's32[1]{0}', space=sflag, size = 0x4, scoped, tag = 'scoped memory for tpu_custom_call.1']
    #allocation13 [shape = 'u8[65536]{0}', space=vmem, size = 0x10000, scoped, tag = 'input window, operand 7, single buffered']
    #allocation14 [shape = 'u8[8192]{0}', space=vmem, size = 0x2000, scoped, tag = 'output window, operand 0, single buffered']
    %13 = vsyncpa [#allocation3], 0
    %14 = vsyncpa [#allocation6], 0
    %15 = vsyncpa [#allocation9], 0
    %16 = vsyncpa [#allocation12], 0
    %17 = vsyncpa [#allocation4], 0
    // Predicated region
    $region2: #{tpu_custom_call.1} parent=1 // pred_check
      _
    $region3: #{tpu_custom_call.1} parent=1 // pred_check_branch
      %19 = sbr.rel (0) target = $region5
    $region4: #{tpu_custom_call.1} parent=1 // pred_region
      %s21 = ssub.s32 128, 128
      %22 = vsyncadd [#allocation3], %s21
      %s24 = sshll.u32 [#allocation2], 4
      %s25 = int_to_ptr.vmem [resolvable:$true] %s24
      %27 = dma.hbm_to_vmem [thread:$0]  %s0, 128, %s25, [#allocation3]
    $region5: #{tpu_custom_call.1} parent=1 // pred_fallthru
      _
    // Predicated region
    $region6: #{tpu_custom_call.1} parent=1 // pred_check
      _
    $region7: #{tpu_custom_call.1} parent=1 // pred_check_branch
      %29 = sbr.rel (0) target = $region9
    $region8: #{tpu_custom_call.1} parent=1 // pred_region
      %s31 = ssub.s32 128, 128
      %32 = vsyncadd [#allocation6], %s31
      %s34 = sshll.u32 [#allocation5], 4
      %s35 = int_to_ptr.vmem [resolvable:$true] %s34
      %37 = dma.hbm_to_vmem [thread:$0]  %s1, 128, %s35, [#allocation6]
    $region9: #{tpu_custom_call.1} parent=1 // pred_fallthru
      _
    // Predicated region
    $region10: #{tpu_custom_call.1} parent=1 // pred_check
      _
    $region11: #{tpu_custom_call.1} parent=1 // pred_check_branch
      %39 = sbr.rel (0) target = $region13
    $region12: #{tpu_custom_call.1} parent=1 // pred_region
      %s41 = ssub.s32 128, 128
      %42 = vsyncadd [#allocation6], %s41
      %s44 = sshll.u32 [#allocation7], 4
      %s45 = int_to_ptr.vmem [resolvable:$true] %s44
      %47 = dma.hbm_to_vmem [thread:$0]  %s2, 128, %s45, [#allocation6]
    $region13: #{tpu_custom_call.1} parent=1 // pred_fallthru
      _
    // Predicated region
    $region14: #{tpu_custom_call.1} parent=1 // pred_check
      _
    $region15: #{tpu_custom_call.1} parent=1 // pred_check_branch
      %49 = sbr.rel (0) target = $region17
    $region16: #{tpu_custom_call.1} parent=1 // pred_region
      _
    $region17: #{tpu_custom_call.1} parent=1 // pred_fallthru
      _
    // Predicated region
    $region18: #{tpu_custom_call.1} parent=1 // pred_check
      _
    $region19: #{tpu_custom_call.1} parent=1 // pred_check_branch
      %51 = sbr.rel (0) target = $region21
    $region20: #{tpu_custom_call.1} parent=1 // pred_region
      %s53 = ssub.s32 2048, 2048
      %54 = vsyncadd [#allocation9], %s53
      %s55 = sshll.u32 [#allocation8], 4
      %s56 = int_to_ptr.vmem [resolvable:$true] %s55
      %61 = dma.hbm_to_vmem [thread:$0]  %s4, 2048, %s56, [#allocation9], 256, 256, 16
    $region21: #{tpu_custom_call.1} parent=1 // pred_fallthru
      _
    // Predicated region
    $region22: #{tpu_custom_call.1} parent=1 // pred_check
      _
    $region23: #{tpu_custom_call.1} parent=1 // pred_check_branch
      %63 = sbr.rel (0) target = $region25
    $region24: #{tpu_custom_call.1} parent=1 // pred_region
      %s65 = ssub.s32 2048, 2048
      %66 = vsyncadd [#allocation9], %s65
      %s67 = sshll.u32 [#allocation10], 4
      %s68 = int_to_ptr.vmem [resolvable:$true] %s67
      %73 = dma.hbm_to_vmem [thread:$0]  %s5, 2048, %s68, [#allocation9], 256, 256, 16
    $region25: #{tpu_custom_call.1} parent=1 // pred_fallthru
      _
    // Predicated region
    $region26: #{tpu_custom_call.1} parent=1 // pred_check
      _
    $region27: #{tpu_custom_call.1} parent=1 // pred_check_branch
      %75 = sbr.rel (0) target = $region29
    $region28: #{tpu_custom_call.1} parent=1 // pred_region
      %s77 = ssub.s32 2048, 2048
      %78 = vsyncadd [#allocation12], %s77
      %s79 = sshll.u32 [#allocation11], 4
      %s80 = int_to_ptr.vmem [resolvable:$true] %s79
      %85 = dma.hbm_to_vmem [thread:$0]  %s6, 2048, %s80, [#allocation12], 256, 256, 16
    $region29: #{tpu_custom_call.1} parent=1 // pred_fallthru
      _
    // Predicated region
    $region30: #{tpu_custom_call.1} parent=1 // pred_check
      _
    $region31: #{tpu_custom_call.1} parent=1 // pred_check_branch
      %87 = sbr.rel (0) target = $region33
    $region32: #{tpu_custom_call.1} parent=1 // pred_region
      %s89 = ssub.s32 2048, 2048
      %90 = vsyncadd [#allocation12], %s89
      %s91 = sshll.u32 [#allocation13], 4
      %s92 = int_to_ptr.vmem [resolvable:$true] %s91
      %97 = dma.hbm_to_vmem [thread:$0]  %s7, 2048, %s92, [#allocation12], 256, 256, 16
    $region33: #{tpu_custom_call.1} parent=1 // pred_fallthru
      _
    // Predicated region
    $region34: #{tpu_custom_call.1} parent=1 // pred_check
      _
    $region35: #{tpu_custom_call.1} parent=1 // pred_check_branch
      %99 = sbr.rel (0) target = $region37
    $region36: #{tpu_custom_call.1} parent=1 // pred_region
      %100 = dma.done [#allocation3], 128
    $region37: #{tpu_custom_call.1} parent=1 // pred_fallthru
      _
    // Predicated region
    $region38: #{tpu_custom_call.1} parent=1 // pred_check
      _
    $region39: #{tpu_custom_call.1} parent=1 // pred_check_branch
      %102 = sbr.rel (0) target = $region41
    $region40: #{tpu_custom_call.1} parent=1 // pred_region
      %103 = dma.done [#allocation6], 128
    $region41: #{tpu_custom_call.1} parent=1 // pred_fallthru
      _
    // Predicated region
    $region42: #{tpu_custom_call.1} parent=1 // pred_check
      _
    $region43: #{tpu_custom_call.1} parent=1 // pred_check_branch
      %105 = sbr.rel (0) target = $region45
    $region44: #{tpu_custom_call.1} parent=1 // pred_region
      %106 = dma.done [#allocation6], 128
    $region45: #{tpu_custom_call.1} parent=1 // pred_fallthru
      _
    // Predicated region
    $region46: #{tpu_custom_call.1} parent=1 // pred_check
      _
    $region47: #{tpu_custom_call.1} parent=1 // pred_check_branch
      %108 = sbr.rel (0) target = $region49
    $region48: #{tpu_custom_call.1} parent=1 // pred_region
      %109 = dma.done [#allocation9], 2048
    $region49: #{tpu_custom_call.1} parent=1 // pred_fallthru
      _
    // Predicated region
    $region50: #{tpu_custom_call.1} parent=1 // pred_check
      _
    $region51: #{tpu_custom_call.1} parent=1 // pred_check_branch
      %111 = sbr.rel (0) target = $region53
    $region52: #{tpu_custom_call.1} parent=1 // pred_region
      %112 = dma.done [#allocation9], 2048
    $region53: #{tpu_custom_call.1} parent=1 // pred_fallthru
      _
    // Predicated region
    $region54: #{tpu_custom_call.1} parent=1 // pred_check
      _
    $region55: #{tpu_custom_call.1} parent=1 // pred_check_branch
      %114 = sbr.rel (0) target = $region57
    $region56: #{tpu_custom_call.1} parent=1 // pred_region
      %115 = dma.done [#allocation12], 2048
    $region57: #{tpu_custom_call.1} parent=1 // pred_fallthru
      _
    // Predicated region
    $region58: #{tpu_custom_call.1} parent=1 // pred_check
      _
    $region59: #{tpu_custom_call.1} parent=1 // pred_check_branch
      %117 = sbr.rel (0) target = $region61
    $region60: #{tpu_custom_call.1} parent=1 // pred_region
      %118 = dma.done [#allocation12], 2048
    $region61: #{tpu_custom_call.1} parent=1 // pred_fallthru
      _
    %v119 = vld [vmem:[#allocation2] sm:$0xff]
    %v120 = vld [vmem:[#allocation8] sm:$0xff]
    %v121 = vld [vmem:[#allocation8 + $0x8] sm:$0xff]
    %v122 = vld [vmem:[#allocation8 + $0x10] sm:$0xff]
    %v123 = vld [vmem:[#allocation8 + $0x18] sm:$0xff]
    %v124 = vld [vmem:[#allocation8 + $0x20] sm:$0xff]
    %v125 = vld [vmem:[#allocation8 + $0x28] sm:$0xff]
    %v126 = vld [vmem:[#allocation8 + $0x30] sm:$0xff]
    %v127 = vld [vmem:[#allocation8 + $0x38] sm:$0xff]
    %v128 = vld [vmem:[#allocation8 + $0x40] sm:$0xff]
    %v129 = vld [vmem:[#allocation8 + $0x48] sm:$0xff]
    %v130 = vld [vmem:[#allocation8 + $0x50] sm:$0xff]
    %v131 = vld [vmem:[#allocation8 + $0x58] sm:$0xff]
    %v132 = vld [vmem:[#allocation8 + $0x60] sm:$0xff]
    %v133 = vld [vmem:[#allocation8 + $0x68] sm:$0xff]
    %v134 = vld [vmem:[#allocation8 + $0x70] sm:$0xff]
    %v135 = vld [vmem:[#allocation8 + $0x78] sm:$0xff]
    %v136 = vld [vmem:[#allocation5] sm:$0xff]
    %v137 = vld [vmem:[#allocation10] sm:$0xff]
    %v138 = vld [vmem:[#allocation10 + $0x8] sm:$0xff]
    %v139 = vld [vmem:[#allocation10 + $0x10] sm:$0xff]
    %v140 = vld [vmem:[#allocation10 + $0x18] sm:$0xff]
    %v141 = vld [vmem:[#allocation10 + $0x20] sm:$0xff]
    %v142 = vld [vmem:[#allocation10 + $0x28] sm:$0xff]
    %v143 = vld [vmem:[#allocation10 + $0x30] sm:$0xff]
    %v144 = vld [vmem:[#allocation10 + $0x38] sm:$0xff]
    %v145 = vld [vmem:[#allocation10 + $0x40] sm:$0xff]
    %v146 = vld [vmem:[#allocation10 + $0x48] sm:$0xff]
    %v147 = vld [vmem:[#allocation10 + $0x50] sm:$0xff]
    %v148 = vld [vmem:[#allocation10 + $0x58] sm:$0xff]
    %v149 = vld [vmem:[#allocation10 + $0x60] sm:$0xff]
    %v150 = vld [vmem:[#allocation10 + $0x68] sm:$0xff]
    %v151 = vld [vmem:[#allocation10 + $0x70] sm:$0xff]
    %v152 = vld [vmem:[#allocation10 + $0x78] sm:$0xff]
    %vm153 = vcmask 523264
    %v155 = vsel %vm153, %v136, 0
    %157 = vmatprep.subr.mxu0 %v138
    %158 = vmatpush1.msra.mxu0 %v137
    %159 = vmatprep.subr.mxu0 %v140
    %160 = vmatpush1.msra.mxu0 %v139
    %161 = vmatprep.subr.mxu0 %v142
    %162 = vmatpush1.msra.mxu0 %v141
    %163 = vmatprep.subr.mxu0 %v144
    %164 = vmatpush1.msra.mxu0 %v143
    %165 = vmatprep.subr.mxu0 %v146
    %166 = vmatpush1.msra.mxu0 %v145
    %167 = vmatprep.subr.mxu0 %v148
    %168 = vmatpush1.msra.mxu0 %v147
    %169 = vmatprep.subr.mxu0 %v150
    %170 = vmatpush1.msra.mxu0 %v149
    %171 = vmatprep.subr.mxu0 %v152
    %172 = vmatpush1.msra.mxu0 %v151
    %173 = vmatprep.subr.mxu0 0.0
    %174 = vmatpush1.msra.mxu0 0.0
    %175 = vmatprep.subr.mxu0 0.0
    %176 = vmatpush1.msra.mxu0 0.0
    %177 = vmatprep.subr.mxu0 0.0
    %178 = vmatpush1.msra.mxu0 0.0
    %179 = vmatprep.subr.mxu0 0.0
    %180 = vmatpush1.msra.mxu0 0.0
    %181 = vmatprep.subr.mxu0 0.0
    %182 = vmatpush1.msra.mxu0 0.0
    %183 = vmatprep.subr.mxu0 0.0
    %184 = vmatpush1.msra.mxu0 0.0
    %185 = vmatprep.subr.mxu0 0.0
    %186 = vmatpush1.msra.mxu0 0.0
    %187 = vmatprep.subr.mxu0 0.0
    %188 = vmatpush1.msra.mxu0 0.0
    %189 = vmatprep.subr.mxu0 0.0
    %190 = vmatpush1.msra.mxu0 0.0
    %191 = vmatprep.subr.mxu0 0.0
    %192 = vmatpush1.msra.mxu0 0.0
    %193 = vmatprep.subr.mxu0 0.0
    %194 = vmatpush1.msra.mxu0 0.0
    %195 = vmatprep.subr.mxu0 0.0
    %196 = vmatpush1.msra.mxu0 0.0
    %197 = vmatprep.subr.mxu0 0.0
    %198 = vmatpush1.msra.mxu0 0.0
    %199 = vmatprep.subr.mxu0 0.0
    %200 = vmatpush1.msra.mxu0 0.0
    %201 = vmatprep.subr.mxu0 0.0
    %202 = vmatpush1.msra.mxu0 0.0
    %203 = vmatprep.subr.mxu0 0.0
    %204 = vmatpush1.msra.mxu0 0.0
    %205 = vmatprep.subr.mxu0 0.0
    %206 = vmatpush1.msra.mxu0 0.0
    %207 = vmatprep.subr.mxu0 0.0
    %208 = vmatpush1.msra.mxu0 0.0
    %209 = vmatprep.subr.mxu0 0.0
    %210 = vmatpush1.msra.mxu0 0.0
    %211 = vmatprep.subr.mxu0 0.0
    %212 = vmatpush1.msra.mxu0 0.0
    %213 = vmatprep.subr.mxu0 0.0
    %214 = vmatpush1.msra.mxu0 0.0
    %215 = vmatprep.subr.mxu0 0.0
    %216 = vmatpush1.msra.mxu0 0.0
    %217 = vmatprep.subr.mxu0 0.0
    %218 = vmatpush1.msra.mxu0 0.0
    %219 = vmatprep.subr.mxu0 0.0
    %220 = vmatpush1.msra.mxu0 0.0
    %221 = vmatprep.mubr.f32.mxu0 0.0
    %222 = vmatmul.mubr.f32.gmra.mrb[0].mxu0 %v155
    %v223 = vpop.f32.mrb[0].mxu0
    %v224 = vadd.f32 0.0, %v223
    %v225 = vpop.f32.mrb[0].mxu0
    %v226 = vadd.f32 0.0, %v225
    %227 = vdwg.mxu0
    %v229 = vsel %vm153, %v119, 0
    %231 = vmatprep.subr.mxu0 %v121
    %232 = vmatpush1.msra.mxu0 %v120
    %233 = vmatprep.subr.mxu0 %v123
    %234 = vmatpush1.msra.mxu0 %v122
    %235 = vmatprep.subr.mxu0 %v125
    %236 = vmatpush1.msra.mxu0 %v124
    %237 = vmatprep.subr.mxu0 %v127
    %238 = vmatpush1.msra.mxu0 %v126
    %239 = vmatprep.subr.mxu0 %v129
    %240 = vmatpush1.msra.mxu0 %v128
    %241 = vmatprep.subr.mxu0 %v131
    %242 = vmatpush1.msra.mxu0 %v130
    %243 = vmatprep.subr.mxu0 %v133
    %244 = vmatpush1.msra.mxu0 %v132
    %245 = vmatprep.subr.mxu0 %v135
    %246 = vmatpush1.msra.mxu0 %v134
    %247 = vmatprep.subr.mxu0 0.0
    %248 = vmatpush1.msra.mxu0 0.0
    %249 = vmatprep.subr.mxu0 0.0
    %250 = vmatpush1.msra.mxu0 0.0
    %251 = vmatprep.subr.mxu0 0.0
    %252 = vmatpush1.msra.mxu0 0.0
    %253 = vmatprep.subr.mxu0 0.0
    %254 = vmatpush1.msra.mxu0 0.0
    %255 = vmatprep.subr.mxu0 0.0
    %256 = vmatpush1.msra.mxu0 0.0
    %257 = vmatprep.subr.mxu0 0.0
    %258 = vmatpush1.msra.mxu0 0.0
    %259 = vmatprep.subr.mxu0 0.0
    %260 = vmatpush1.msra.mxu0 0.0
    %261 = vmatprep.subr.mxu0 0.0
    %262 = vmatpush1.msra.mxu0 0.0
    %263 = vmatprep.subr.mxu0 0.0
    %264 = vmatpush1.msra.mxu0 0.0
    %265 = vmatprep.subr.mxu0 0.0
    %266 = vmatpush1.msra.mxu0 0.0
    %267 = vmatprep.subr.mxu0 0.0
    %268 = vmatpush1.msra.mxu0 0.0
    %269 = vmatprep.subr.mxu0 0.0
    %270 = vmatpush1.msra.mxu0 0.0
    %271 = vmatprep.subr.mxu0 0.0
    %272 = vmatpush1.msra.mxu0 0.0
    %273 = vmatprep.subr.mxu0 0.0
    %274 = vmatpush1.msra.mxu0 0.0
    %275 = vmatprep.subr.mxu0 0.0
    %276 = vmatpush1.msra.mxu0 0.0
    %277 = vmatprep.subr.mxu0 0.0
    %278 = vmatpush1.msra.mxu0 0.0
    %279 = vmatprep.subr.mxu0 0.0
    %280 = vmatpush1.msra.mxu0 0.0
    %281 = vmatprep.subr.mxu0 0.0
    %282 = vmatpush1.msra.mxu0 0.0
    %283 = vmatprep.subr.mxu0 0.0
    %284 = vmatpush1.msra.mxu0 0.0
    %285 = vmatprep.subr.mxu0 0.0
    %286 = vmatpush1.msra.mxu0 0.0
    %287 = vmatprep.subr.mxu0 0.0
    %288 = vmatpush1.msra.mxu0 0.0
    %289 = vmatprep.subr.mxu0 0.0
    %290 = vmatpush1.msra.mxu0 0.0
    %291 = vmatprep.subr.mxu0 0.0
    %292 = vmatpush1.msra.mxu0 0.0
    %293 = vmatprep.subr.mxu0 0.0
    %294 = vmatpush1.msra.mxu0 0.0
    %295 = vmatprep.mubr.f32.mxu0 0.0
    %296 = vmatmul.mubr.f32.gmra.mrb[0].mxu0 %v229
    %v297 = vpop.f32.mrb[0].mxu0
    %v298 = vadd.f32 %v224, %v297
    %v299 = vpop.f32.mrb[0].mxu0
    %v300 = vadd.f32 %v226, %v299
    %301 = vdwg.mxu0
    %v302 = vld [vmem:[#allocation7] sm:$0xff]
    %v303 = vld [vmem:[#allocation11] sm:$0xff]
    %v304 = vld [vmem:[#allocation11 + $0x8] sm:$0xff]
    %v305 = vld [vmem:[#allocation11 + $0x10] sm:$0xff]
    %v306 = vld [vmem:[#allocation11 + $0x18] sm:$0xff]
    %v307 = vld [vmem:[#allocation11 + $0x20] sm:$0xff]
    %v308 = vld [vmem:[#allocation11 + $0x28] sm:$0xff]
    %v309 = vld [vmem:[#allocation11 + $0x30] sm:$0xff]
    %v310 = vld [vmem:[#allocation11 + $0x38] sm:$0xff]
    %v311 = vld [vmem:[#allocation11 + $0x40] sm:$0xff]
    %v312 = vld [vmem:[#allocation11 + $0x48] sm:$0xff]
    %v313 = vld [vmem:[#allocation11 + $0x50] sm:$0xff]
    %v314 = vld [vmem:[#allocation11 + $0x58] sm:$0xff]
    %v315 = vld [vmem:[#allocation11 + $0x60] sm:$0xff]
    %v316 = vld [vmem:[#allocation11 + $0x68] sm:$0xff]
    %v317 = vld [vmem:[#allocation11 + $0x70] sm:$0xff]
    %v318 = vld [vmem:[#allocation11 + $0x78] sm:$0xff]
    %v320 = vsel %vm153, %v302, 0
    %322 = vmatprep.subr.mxu0 %v304
    %323 = vmatpush1.msra.mxu0 %v303
    %324 = vmatprep.subr.mxu0 %v306
    %325 = vmatpush1.msra.mxu0 %v305
    %326 = vmatprep.subr.mxu0 %v308
    %327 = vmatpush1.msra.mxu0 %v307
    %328 = vmatprep.subr.mxu0 %v310
    %329 = vmatpush1.msra.mxu0 %v309
    %330 = vmatprep.subr.mxu0 %v312
    %331 = vmatpush1.msra.mxu0 %v311
    %332 = vmatprep.subr.mxu0 %v314
    %333 = vmatpush1.msra.mxu0 %v313
    %334 = vmatprep.subr.mxu0 %v316
    %335 = vmatpush1.msra.mxu0 %v315
    %336 = vmatprep.subr.mxu0 %v318
    %337 = vmatpush1.msra.mxu0 %v317
    %338 = vmatprep.subr.mxu0 0.0
    %339 = vmatpush1.msra.mxu0 0.0
    %340 = vmatprep.subr.mxu0 0.0
    %341 = vmatpush1.msra.mxu0 0.0
    %342 = vmatprep.subr.mxu0 0.0
    %343 = vmatpush1.msra.mxu0 0.0
    %344 = vmatprep.subr.mxu0 0.0
    %345 = vmatpush1.msra.mxu0 0.0
    %346 = vmatprep.subr.mxu0 0.0
    %347 = vmatpush1.msra.mxu0 0.0
    %348 = vmatprep.subr.mxu0 0.0
    %349 = vmatpush1.msra.mxu0 0.0
    %350 = vmatprep.subr.mxu0 0.0
    %351 = vmatpush1.msra.mxu0 0.0
    %352 = vmatprep.subr.mxu0 0.0
    %353 = vmatpush1.msra.mxu0 0.0
    %354 = vmatprep.subr.mxu0 0.0
    %355 = vmatpush1.msra.mxu0 0.0
    %356 = vmatprep.subr.mxu0 0.0
    %357 = vmatpush1.msra.mxu0 0.0
    %358 = vmatprep.subr.mxu0 0.0
    %359 = vmatpush1.msra.mxu0 0.0
    %360 = vmatprep.subr.mxu0 0.0
    %361 = vmatpush1.msra.mxu0 0.0
    %362 = vmatprep.subr.mxu0 0.0
    %363 = vmatpush1.msra.mxu0 0.0
    %364 = vmatprep.subr.mxu0 0.0
    %365 = vmatpush1.msra.mxu0 0.0
    %366 = vmatprep.subr.mxu0 0.0
    %367 = vmatpush1.msra.mxu0 0.0
    %368 = vmatprep.subr.mxu0 0.0
    %369 = vmatpush1.msra.mxu0 0.0
    %370 = vmatprep.subr.mxu0 0.0
    %371 = vmatpush1.msra.mxu0 0.0
    %372 = vmatprep.subr.mxu0 0.0
    %373 = vmatpush1.msra.mxu0 0.0
    %374 = vmatprep.subr.mxu0 0.0
    %375 = vmatpush1.msra.mxu0 0.0
    %376 = vmatprep.subr.mxu0 0.0
    %377 = vmatpush1.msra.mxu0 0.0
    %378 = vmatprep.subr.mxu0 0.0
    %379 = vmatpush1.msra.mxu0 0.0
    %380 = vmatprep.subr.mxu0 0.0
    %381 = vmatpush1.msra.mxu0 0.0
    %382 = vmatprep.subr.mxu0 0.0
    %383 = vmatpush1.msra.mxu0 0.0
    %384 = vmatprep.subr.mxu0 0.0
    %385 = vmatpush1.msra.mxu0 0.0
    %386 = vmatprep.mubr.f32.mxu0 0.0
    %387 = vmatmul.mubr.f32.gmra.mrb[0].mxu0 %v320
    %v388 = vpop.f32.mrb[0].mxu0
    %v389 = vadd.f32 0.0, %v388
    %v390 = vpop.f32.mrb[0].mxu0
    %v391 = vadd.f32 0.0, %v390
    %392 = vdwg.mxu0
    %v393 = vadd.f32 %v298, %v389
    %v394 = vadd.f32 %v300, %v391
    %v395 = vld [vmem:[%s3] sm:$0xff]
    %v396 = vld [vmem:[#allocation13] sm:$0xff]
    %v397 = vld [vmem:[#allocation13 + $0x8] sm:$0xff]
    %v398 = vld [vmem:[#allocation13 + $0x10] sm:$0xff]
    %v399 = vld [vmem:[#allocation13 + $0x18] sm:$0xff]
    %v400 = vld [vmem:[#allocation13 + $0x20] sm:$0xff]
    %v401 = vld [vmem:[#allocation13 + $0x28] sm:$0xff]
    %v402 = vld [vmem:[#allocation13 + $0x30] sm:$0xff]
    %v403 = vld [vmem:[#allocation13 + $0x38] sm:$0xff]
    %v404 = vld [vmem:[#allocation13 + $0x40] sm:$0xff]
    %v405 = vld [vmem:[#allocation13 + $0x48] sm:$0xff]
    %v406 = vld [vmem:[#allocation13 + $0x50] sm:$0xff]
    %v407 = vld [vmem:[#allocation13 + $0x58] sm:$0xff]
    %v408 = vld [vmem:[#allocation13 + $0x60] sm:$0xff]
    %v409 = vld [vmem:[#allocation13 + $0x68] sm:$0xff]
    %v410 = vld [vmem:[#allocation13 + $0x70] sm:$0xff]
    %v411 = vld [vmem:[#allocation13 + $0x78] sm:$0xff]
    %v413 = vsel %vm153, %v395, 0
    %415 = vmatprep.subr.mxu0 %v397
    %416 = vmatpush1.msra.mxu0 %v396
    %417 = vmatprep.subr.mxu0 %v399
    %418 = vmatpush1.msra.mxu0 %v398
    %419 = vmatprep.subr.mxu0 %v401
    %420 = vmatpush1.msra.mxu0 %v400
    %421 = vmatprep.subr.mxu0 %v403
    %422 = vmatpush1.msra.mxu0 %v402
    %423 = vmatprep.subr.mxu0 %v405
    %424 = vmatpush1.msra.mxu0 %v404
    %425 = vmatprep.subr.mxu0 %v407
    %426 = vmatpush1.msra.mxu0 %v406
    %427 = vmatprep.subr.mxu0 %v409
    %428 = vmatpush1.msra.mxu0 %v408
    %429 = vmatprep.subr.mxu0 %v411
    %430 = vmatpush1.msra.mxu0 %v410
    %431 = vmatprep.subr.mxu0 0.0
    %432 = vmatpush1.msra.mxu0 0.0
    %433 = vmatprep.subr.mxu0 0.0
    %434 = vmatpush1.msra.mxu0 0.0
    %435 = vmatprep.subr.mxu0 0.0
    %436 = vmatpush1.msra.mxu0 0.0
    %437 = vmatprep.subr.mxu0 0.0
    %438 = vmatpush1.msra.mxu0 0.0
    %439 = vmatprep.subr.mxu0 0.0
    %440 = vmatpush1.msra.mxu0 0.0
    %441 = vmatprep.subr.mxu0 0.0
    %442 = vmatpush1.msra.mxu0 0.0
    %443 = vmatprep.subr.mxu0 0.0
    %444 = vmatpush1.msra.mxu0 0.0
    %445 = vmatprep.subr.mxu0 0.0
    %446 = vmatpush1.msra.mxu0 0.0
    %447 = vmatprep.subr.mxu0 0.0
    %448 = vmatpush1.msra.mxu0 0.0
    %449 = vmatprep.subr.mxu0 0.0
    %450 = vmatpush1.msra.mxu0 0.0
    %451 = vmatprep.subr.mxu0 0.0
    %452 = vmatpush1.msra.mxu0 0.0
    %453 = vmatprep.subr.mxu0 0.0
    %454 = vmatpush1.msra.mxu0 0.0
    %455 = vmatprep.subr.mxu0 0.0
    %456 = vmatpush1.msra.mxu0 0.0
    %457 = vmatprep.subr.mxu0 0.0
    %458 = vmatpush1.msra.mxu0 0.0
    %459 = vmatprep.subr.mxu0 0.0
    %460 = vmatpush1.msra.mxu0 0.0
    %461 = vmatprep.subr.mxu0 0.0
    %462 = vmatpush1.msra.mxu0 0.0
    %463 = vmatprep.subr.mxu0 0.0
    %464 = vmatpush1.msra.mxu0 0.0
    %465 = vmatprep.subr.mxu0 0.0
    %466 = vmatpush1.msra.mxu0 0.0
    %467 = vmatprep.subr.mxu0 0.0
    %468 = vmatpush1.msra.mxu0 0.0
    %469 = vmatprep.subr.mxu0 0.0
    %470 = vmatpush1.msra.mxu0 0.0
    %471 = vmatprep.subr.mxu0 0.0
    %472 = vmatpush1.msra.mxu0 0.0
    %473 = vmatprep.subr.mxu0 0.0
    %474 = vmatpush1.msra.mxu0 0.0
    %475 = vmatprep.subr.mxu0 0.0
    %476 = vmatpush1.msra.mxu0 0.0
    %477 = vmatprep.subr.mxu0 0.0
    %478 = vmatpush1.msra.mxu0 0.0
    %479 = vmatprep.mubr.f32.mxu0 0.0
    %480 = vmatmul.mubr.f32.gmra.mrb[0].mxu0 %v413
    %v481 = vpop.f32.mrb[0].mxu0
    %v482 = vadd.f32 0.0, %v481
    %v483 = vpop.f32.mrb[0].mxu0
    %v484 = vadd.f32 0.0, %v483
    %485 = vdwg.mxu0
    %v486 = vadd.f32 %v393, %v482
    %v487 = vadd.f32 %v394, %v484
    %488 = vst [vmem:[#allocation14] sm:$0xff] %v486
    %489 = vst [vmem:[#allocation14 + $0x8] sm:$0xff] %v487
    // Predicated region
    $region62: #{tpu_custom_call.1} parent=1 // pred_check
      _
    $region63: #{tpu_custom_call.1} parent=1 // pred_check_branch
      %491 = sbr.rel (0) target = $region65
    $region64: #{tpu_custom_call.1} parent=1 // pred_region
      %s493 = ssub.s32 256, 256
      %494 = vsyncadd [#allocation4], %s493
      %s496 = sshll.u32 [#allocation14], 4
      %s497 = int_to_ptr.vmem [resolvable:$true] %s496
      %499 = dma.vmem_to_hbm [thread:$0]  %s497, 256, %s8, [#allocation4]
    $region65: #{tpu_custom_call.1} parent=1 // pred_fallthru
      _
    // Predicated region
    $region66: #{tpu_custom_call.1} parent=1 // pred_check
      _
    $region67: #{tpu_custom_call.1} parent=1 // pred_check_branch
      %501 = sbr.rel (0) target = $region69
    $region68: #{tpu_custom_call.1} parent=1 // pred_region
      %502 = dma.done [#allocation4], 256
    $region69: #{tpu_custom_call.1} parent=1 // pred_fallthru
      _
    %503 = vsyncpa [#allocation3], 1
    %504 = vsyncpa [#allocation6], 1
    %505 = vsyncpa [#allocation9], 1
    %506 = vsyncpa [#allocation12], 1
    %507 = vsyncpa [#allocation4], 1

</llo_original>
